<compile_context>
chip_gen: v7x
topology: tpu7x:2x2x1
jax: 0.10.0
libtpu: 0.0.40
codegen_flags: <defaults>
</compile_context>

<pallas_src>
import functools

import jax
import jax.numpy as jnp
from jax import lax
from jax.experimental import pallas as pl
from jax.experimental.pallas import tpu as pltpu


def _layernorm(x, gamma, beta, eps=1e-5):
    # f32 elementwise throughout.
    mu = jnp.mean(x, axis=-1, keepdims=True)
    var = jnp.mean((x - mu) ** 2, axis=-1, keepdims=True)
    return (x - mu) * lax.rsqrt(var + eps) * gamma + beta


def encoder_block_kernel(
    vl_ref,                          # scalar-prefetch: valid_lens (B,) int32 (SMEM)
    x_ref,                           # (1, S, D) f32
    wqkv_ref, wo_ref,                # (D, 3D) bf16, (D, D) bf16
    w1_ref, w2_ref,                  # (D, F) bf16, (F, D) bf16
    b1_ref, b2_ref,                  # (1, F) f32, (1, D) f32
    g1_ref, be1_ref,                 # (1, D) f32 layernorm-1 gamma/beta
    g2_ref, be2_ref,                 # (1, D) f32 layernorm-2 gamma/beta
    o_ref,                           # (1, S, D) f32
    *, num_heads):
    b = pl.program_id(0)
    S, D = x_ref.shape[1], x_ref.shape[2]
    Dh = D // num_heads

    X = x_ref[0]                                   # (S, D) f32 (kept for residual)
    Xb = X.astype(jnp.bfloat16)                    # bf16 matmul operands

    # --- fused QKV projection (use_bias=False); scale pre-folded into Wq ---
    QKV = jnp.dot(Xb, wqkv_ref[...], preferred_element_type=jnp.float32)  # (S, 3D)
    Qb = QKV[:, 0 * D:1 * D].astype(jnp.bfloat16)
    Kb = QKV[:, 1 * D:2 * D].astype(jnp.bfloat16)
    Vb = QKV[:, 2 * D:3 * D].astype(jnp.bfloat16)

    # Additive key mask, computed once as a (1, S) row and broadcast.
    vl = vl_ref[b]                                 # scalar valid length for this batch
    col = lax.broadcasted_iota(jnp.int32, (1, S), 1)
    mask_add = jnp.where(col < vl, 0.0, -1e6).astype(jnp.float32)   # (1, S)

    # --- per-head attention, accumulating head_out @ Wo[h] (no concat) ---
    attn_out = jnp.zeros((S, D), jnp.float32)
    for h in range(num_heads):                     # static, small head count
        lo, hi = h * Dh, (h + 1) * Dh
        Qh = Qb[:, lo:hi]                          # (S, Dh) bf16
        Kh = Kb[:, lo:hi]
        Vh = Vb[:, lo:hi]
        scores = lax.dot_general(
            Qh, Kh, (((1,), (1,)), ((), ())),
            preferred_element_type=jnp.float32)    # (S, S) f32 (already scaled)
        scores = scores + mask_add                 # broadcast (1,S) -> (S,S)
        scores = scores - jnp.max(scores, axis=-1, keepdims=True)
        w = jnp.exp(scores)
        attn = w * pl.reciprocal(jnp.sum(w, axis=-1, keepdims=True), approx=True)
        head_out = jnp.dot(attn.astype(jnp.bfloat16), Vh,
                           preferred_element_type=jnp.float32)      # (S, Dh) f32
        attn_out = attn_out + jnp.dot(
            head_out.astype(jnp.bfloat16), wo_ref[lo:hi, :],
            preferred_element_type=jnp.float32)                     # (S, D) f32

    # --- AddLNorm 1 (f32) ---
    Y = _layernorm(X + attn_out, g1_ref[0], be1_ref[0])

    # --- PositionWiseFFN: dense1 -> relu -> dense2 (bf16 matmuls, f32 acc) ---
    Yb = Y.astype(jnp.bfloat16)
    Hid = jnp.dot(Yb, w1_ref[...], preferred_element_type=jnp.float32) + b1_ref[0]
    Hid = jnp.maximum(Hid, 0.0)
    F = jnp.dot(Hid.astype(jnp.bfloat16), w2_ref[...],
                preferred_element_type=jnp.float32) + b2_ref[0]

    # --- AddLNorm 2 (f32) ---
    Z = _layernorm(Y + F, g2_ref[0], be2_ref[0])

    o_ref[0] = Z.astype(o_ref.dtype)


def transformer_encoder_block(x, valid_lens, params, num_heads):
    B, S, D = x.shape
    Dh = D // num_heads
    bf16 = jnp.bfloat16

    # Fuse QKV projection weights; fold the softmax scale into the Q block.
    # (Done once per call in the wrapper on a small weight — effectively free.)
    scale = 1.0 / jnp.sqrt(jnp.float32(Dh))
    wqkv = jnp.concatenate(
        [params["wq"] * scale, params["wk"], params["wv"]], axis=1).astype(bf16)

    param_list = [
        wqkv, params["wo"].astype(bf16),
        params["w1"].astype(bf16), params["w2"].astype(bf16),
        params["b1"], params["b2"],
        params["g1"], params["be1"], params["g2"], params["be2"],
    ]

    # Constant block index across the grid -> weights stay resident in VMEM.
    weight_specs = [
        pl.BlockSpec(p.shape, (lambda b, vl, nd=p.ndim: (0,) * nd))
        for p in param_list
    ]

    grid_spec = pltpu.PrefetchScalarGridSpec(
        num_scalar_prefetch=1,
        grid=(B,),
        in_specs=[pl.BlockSpec((1, S, D), lambda b, vl: (b, 0, 0))] + weight_specs,
        out_specs=pl.BlockSpec((1, S, D), lambda b, vl: (b, 0, 0)),
    )

    kernel = functools.partial(encoder_block_kernel, num_heads=num_heads)

    return pl.pallas_call(
        kernel,
        out_shape=jax.ShapeDtypeStruct((B, S, D), jnp.float32),
        grid_spec=grid_spec,
        compiler_params=pltpu.CompilerParams(
            dimension_semantics=("parallel",),
            vmem_limit_bytes=64 * 1024 * 1024),
    )(valid_lens, x, *param_list)


def reference_block(x, valid_lens, params, num_heads):
    """Pure-JAX f32 reference (same math as the PyTorch module in eval mode)."""
    B, S, D = x.shape
    Dh = D // num_heads
    Q = x @ params["wq"]
    K = x @ params["wk"]
    V = x @ params["wv"]

    def split(t):  # (B,S,D) -> (B,H,S,Dh)
        return t.reshape(B, S, num_heads, Dh).transpose(0, 2, 1, 3)

    Qh, Kh, Vh = split(Q), split(K), split(V)
    scores = jnp.einsum("bhqd,bhkd->bhqk", Qh, Kh) / jnp.sqrt(Dh)
    col = jnp.arange(S)[None, None, None, :]
    mask = col < valid_lens[:, None, None, None]
    scores = jnp.where(mask, scores, -1e6)
    attn = jax.nn.softmax(scores, axis=-1)
    O = jnp.einsum("bhqk,bhkd->bhqd", attn, Vh)
    O = O.transpose(0, 2, 1, 3).reshape(B, S, D) @ params["wo"]

    def ln(t, g, b):
        mu = t.mean(-1, keepdims=True)
        var = ((t - mu) ** 2).mean(-1, keepdims=True)
        return (t - mu) / jnp.sqrt(var + 1e-5) * g + b

    Y = ln(x + O, params["g1"][0], params["be1"][0])
    H = jnp.maximum(Y @ params["w1"] + params["b1"][0], 0.0)
    F = H @ params["w2"] + params["b2"][0]
    return ln(Y + F, params["g2"][0], params["be2"][0])


if __name__ == "__main__":
    B, S, D = 2, 8, 32          # batch, seq_len, num_hiddens
    NUM_HEADS = 4
    FFN_HIDDENS = 64

    key = jax.random.PRNGKey(0)
    keys = jax.random.split(key, 8)

    def init(k, shape, scale=0.1):
        return (scale * jax.random.normal(k, shape)).astype(jnp.float32)

    params = {
        "wq": init(keys[0], (D, D)),
        "wk": init(keys[1], (D, D)),
        "wv": init(keys[2], (D, D)),
        "wo": init(keys[3], (D, D)),
        "w1": init(keys[4], (D, FFN_HIDDENS)),
        "b1": jnp.zeros((1, FFN_HIDDENS), jnp.float32),
        "w2": init(keys[5], (FFN_HIDDENS, D)),
        "b2": jnp.zeros((1, D), jnp.float32),
        "g1": jnp.ones((1, D), jnp.float32),
        "be1": jnp.zeros((1, D), jnp.float32),
        "g2": jnp.ones((1, D), jnp.float32),
        "be2": jnp.zeros((1, D), jnp.float32),
    }

    x = init(keys[6], (B, S, D), scale=1.0)
    valid_lens = jnp.array([5, 8], dtype=jnp.int32)   # per-batch valid lengths

    out = transformer_encoder_block(x, valid_lens, params, NUM_HEADS)
    out = jax.block_until_ready(out)

    ref = reference_block(x, valid_lens, params, NUM_HEADS)
    assert out.shape == (B, S, D)
    # Tolerance loosened for bf16 matmul operands + approx softmax reciprocal.
    assert jnp.allclose(out, ref, atol=3e-2, rtol=3e-2), "mismatch vs reference"

    print("KERNEL_OK")
</pallas_src>

<mosaic_0001>
module attributes {stable_mosaic.version = 11 : i64} {
  func.func @encoder_block_kernel(%arg0: i32, %arg1: memref<2xi32, #tpu.memory_space<smem>>, %arg2: memref<1x8x32xf32, #tpu.memory_space<vmem>>, %arg3: memref<32x96xbf16, #tpu.memory_space<vmem>>, %arg4: memref<32x32xbf16, #tpu.memory_space<vmem>>, %arg5: memref<32x64xbf16, #tpu.memory_space<vmem>>, %arg6: memref<64x32xbf16, #tpu.memory_space<vmem>>, %arg7: memref<1x64xf32, #tpu.memory_space<vmem>>, %arg8: memref<1x32xf32, #tpu.memory_space<vmem>>, %arg9: memref<1x32xf32, #tpu.memory_space<vmem>>, %arg10: memref<1x32xf32, #tpu.memory_space<vmem>>, %arg11: memref<1x32xf32, #tpu.memory_space<vmem>>, %arg12: memref<1x32xf32, #tpu.memory_space<vmem>>, %arg13: memref<1x8x32xf32, #tpu.memory_space<vmem>>) attributes {dimension_semantics = [#tpu.dimension_semantics<parallel>], iteration_bounds = array<i64: 2>, scalar_prefetch = 1 : i64, scratch_operands = 0 : i64, tpu.core_type = #tpu.core_type<tc>, window_params = [{transform_indices = @transform_0, window_bounds = array<i64: 1, 8, 32>}, {pipeline_mode = #tpu.pipeline_mode<synchronous>, transform_indices = @transform_1, window_bounds = array<i64: 32, 96>}, {pipeline_mode = #tpu.pipeline_mode<synchronous>, transform_indices = @transform_2, window_bounds = array<i64: 32, 32>}, {pipeline_mode = #tpu.pipeline_mode<synchronous>, transform_indices = @transform_3, window_bounds = array<i64: 32, 64>}, {pipeline_mode = #tpu.pipeline_mode<synchronous>, transform_indices = @transform_4, window_bounds = array<i64: 64, 32>}, {pipeline_mode = #tpu.pipeline_mode<synchronous>, transform_indices = @transform_5, window_bounds = array<i64: 1, 64>}, {pipeline_mode = #tpu.pipeline_mode<synchronous>, transform_indices = @transform_6, window_bounds = array<i64: 1, 32>}, {pipeline_mode = #tpu.pipeline_mode<synchronous>, transform_indices = @transform_7, window_bounds = array<i64: 1, 32>}, {pipeline_mode = #tpu.pipeline_mode<synchronous>, transform_indices = @transform_8, window_bounds = array<i64: 1, 32>}, {pipeline_mode = #tpu.pipeline_mode<synchronous>, transform_indices = @transform_9, window_bounds = array<i64: 1, 32>}, {pipeline_mode = #tpu.pipeline_mode<synchronous>, transform_indices = @transform_10, window_bounds = array<i64: 1, 32>}, {transform_indices = @transform_11, window_bounds = array<i64: 1, 8, 32>}]} {
    %c0 = arith.constant 0 : index
    %c0_0 = arith.constant 0 : index
    %c0_1 = arith.constant 0 : index
    %0 = vector.load %arg2[%c0, %c0_0, %c0_1] : memref<1x8x32xf32, #tpu.memory_space<vmem>>, vector<1x8x32xf32>
    %1 = vector.shape_cast %0 : vector<1x8x32xf32> to vector<8x32xf32>
    %2 = arith.truncf %1 : vector<8x32xf32> to vector<8x32xbf16>
    %c0_2 = arith.constant 0 : index
    %c0_3 = arith.constant 0 : index
    %3 = vector.load %arg3[%c0_2, %c0_3] : memref<32x96xbf16, #tpu.memory_space<vmem>>, vector<32x96xbf16>
    %cst = arith.constant dense<0.000000e+00> : vector<8x96xf32>
    %4 = tpu.matmul %2, %3, %cst {dimension_numbers = #tpu.dot_dimension_numbers<[1], [0], [0], [1], [0, 0, 1, 1], [], []>} : vector<8x32xbf16>, vector<32x96xbf16>, vector<8x96xf32> -> vector<8x96xf32>
    %5 = vector.extract_strided_slice %4 {offsets = [0, 0], sizes = [8, 32], strides = [1, 1]} : vector<8x96xf32> to vector<8x32xf32>
    %6 = arith.truncf %5 : vector<8x32xf32> to vector<8x32xbf16>
    %7 = vector.extract_strided_slice %4 {offsets = [0, 32], sizes = [8, 32], strides = [1, 1]} : vector<8x96xf32> to vector<8x32xf32>
    %8 = arith.truncf %7 : vector<8x32xf32> to vector<8x32xbf16>
    %9 = vector.extract_strided_slice %4 {offsets = [0, 64], sizes = [8, 32], strides = [1, 1]} : vector<8x96xf32> to vector<8x32xf32>
    %10 = arith.truncf %9 : vector<8x32xf32> to vector<8x32xbf16>
    %11 = arith.index_cast %arg0 : i32 to index
    %12 = memref.load %arg1[%11] : memref<2xi32, #tpu.memory_space<smem>>
    %13 = tpu.iota {dimensions = array<i32: 1>} : vector<1x8xi32>
    %14 = vector.broadcast %12 : i32 to vector<1x8xi32>
    %15 = arith.cmpi slt, %13, %14 : vector<1x8xi32>
    %cst_4 = arith.constant 0.000000e+00 : f32
    %cst_5 = arith.constant -1.000000e+06 : f32
    %16 = vector.broadcast %cst_4 : f32 to vector<1x8xf32>
    %17 = vector.broadcast %cst_5 : f32 to vector<1x8xf32>
    %18 = arith.select %15, %16, %17 : vector<1x8xi1>, vector<1x8xf32>
    %cst_6 = arith.constant 0.000000e+00 : f32
    %19 = vector.broadcast %cst_6 : f32 to vector<8x32xf32>
    %20 = vector.extract_strided_slice %6 {offsets = [0, 0], sizes = [8, 8], strides = [1, 1]} : vector<8x32xbf16> to vector<8x8xbf16>
    %21 = vector.extract_strided_slice %8 {offsets = [0, 0], sizes = [8, 8], strides = [1, 1]} : vector<8x32xbf16> to vector<8x8xbf16>
    %22 = vector.extract_strided_slice %10 {offsets = [0, 0], sizes = [8, 8], strides = [1, 1]} : vector<8x32xbf16> to vector<8x8xbf16>
    %cst_7 = arith.constant dense<0.000000e+00> : vector<8x8xf32>
    %23 = tpu.matmul %20, %21, %cst_7 {dimension_numbers = #tpu.dot_dimension_numbers<[1], [1], [0], [0], [0, 0, 1, 0], [], []>} : vector<8x8xbf16>, vector<8x8xbf16>, vector<8x8xf32> -> vector<8x8xf32>
    %24 = vector.broadcast %18 : vector<1x8xf32> to vector<8x8xf32>
    %25 = arith.addf %23, %24 : vector<8x8xf32>
    %cst_8 = arith.constant dense<0xFF800000> : vector<8xf32>
    %26 = vector.multi_reduction <maximumf>, %25, %cst_8 [1] : vector<8x8xf32> to vector<8xf32>
    %27 = vector.shape_cast %26 : vector<8xf32> to vector<8x1xf32>
    %28 = vector.broadcast %27 : vector<8x1xf32> to vector<8x8xf32>
    %29 = arith.subf %25, %28 : vector<8x8xf32>
    %30 = math.exp %29 : vector<8x8xf32>
    %cst_9 = arith.constant dense<0.000000e+00> : vector<8xf32>
    %31 = vector.multi_reduction <add>, %30, %cst_9 [1] : vector<8x8xf32> to vector<8xf32>
    %32 = vector.shape_cast %31 : vector<8xf32> to vector<8x1xf32>
    %33 = tpu.reciprocal %32 {approx = true} : vector<8x1xf32> -> vector<8x1xf32>
    %34 = vector.broadcast %33 : vector<8x1xf32> to vector<8x8xf32>
    %35 = arith.mulf %30, %34 : vector<8x8xf32>
    %36 = arith.truncf %35 : vector<8x8xf32> to vector<8x8xbf16>
    %cst_10 = arith.constant dense<0.000000e+00> : vector<8x8xf32>
    %37 = tpu.matmul %36, %22, %cst_10 {dimension_numbers = #tpu.dot_dimension_numbers<[1], [0], [0], [1], [0, 0, 1, 1], [], []>} : vector<8x8xbf16>, vector<8x8xbf16>, vector<8x8xf32> -> vector<8x8xf32>
    %38 = arith.truncf %37 : vector<8x8xf32> to vector<8x8xbf16>
    %c0_11 = arith.constant 0 : index
    %c0_12 = arith.constant 0 : index
    %39 = vector.load %arg4[%c0_11, %c0_12] : memref<32x32xbf16, #tpu.memory_space<vmem>>, vector<8x32xbf16>
    %cst_13 = arith.constant dense<0.000000e+00> : vector<8x32xf32>
    %40 = tpu.matmul %38, %39, %cst_13 {dimension_numbers = #tpu.dot_dimension_numbers<[1], [0], [0], [1], [0, 0, 1, 1], [], []>} : vector<8x8xbf16>, vector<8x32xbf16>, vector<8x32xf32> -> vector<8x32xf32>
    %41 = arith.addf %19, %40 : vector<8x32xf32>
    %42 = vector.extract_strided_slice %6 {offsets = [0, 8], sizes = [8, 8], strides = [1, 1]} : vector<8x32xbf16> to vector<8x8xbf16>
    %43 = vector.extract_strided_slice %8 {offsets = [0, 8], sizes = [8, 8], strides = [1, 1]} : vector<8x32xbf16> to vector<8x8xbf16>
    %44 = vector.extract_strided_slice %10 {offsets = [0, 8], sizes = [8, 8], strides = [1, 1]} : vector<8x32xbf16> to vector<8x8xbf16>
    %cst_14 = arith.constant dense<0.000000e+00> : vector<8x8xf32>
    %45 = tpu.matmul %42, %43, %cst_14 {dimension_numbers = #tpu.dot_dimension_numbers<[1], [1], [0], [0], [0, 0, 1, 0], [], []>} : vector<8x8xbf16>, vector<8x8xbf16>, vector<8x8xf32> -> vector<8x8xf32>
    %46 = vector.broadcast %18 : vector<1x8xf32> to vector<8x8xf32>
    %47 = arith.addf %45, %46 : vector<8x8xf32>
    %cst_15 = arith.constant dense<0xFF800000> : vector<8xf32>
    %48 = vector.multi_reduction <maximumf>, %47, %cst_15 [1] : vector<8x8xf32> to vector<8xf32>
    %49 = vector.shape_cast %48 : vector<8xf32> to vector<8x1xf32>
    %50 = vector.broadcast %49 : vector<8x1xf32> to vector<8x8xf32>
    %51 = arith.subf %47, %50 : vector<8x8xf32>
    %52 = math.exp %51 : vector<8x8xf32>
    %cst_16 = arith.constant dense<0.000000e+00> : vector<8xf32>
    %53 = vector.multi_reduction <add>, %52, %cst_16 [1] : vector<8x8xf32> to vector<8xf32>
    %54 = vector.shape_cast %53 : vector<8xf32> to vector<8x1xf32>
    %55 = tpu.reciprocal %54 {approx = true} : vector<8x1xf32> -> vector<8x1xf32>
    %56 = vector.broadcast %55 : vector<8x1xf32> to vector<8x8xf32>
    %57 = arith.mulf %52, %56 : vector<8x8xf32>
    %58 = arith.truncf %57 : vector<8x8xf32> to vector<8x8xbf16>
    %cst_17 = arith.constant dense<0.000000e+00> : vector<8x8xf32>
    %59 = tpu.matmul %58, %44, %cst_17 {dimension_numbers = #tpu.dot_dimension_numbers<[1], [0], [0], [1], [0, 0, 1, 1], [], []>} : vector<8x8xbf16>, vector<8x8xbf16>, vector<8x8xf32> -> vector<8x8xf32>
    %60 = arith.truncf %59 : vector<8x8xf32> to vector<8x8xbf16>
    %c8 = arith.constant 8 : index
    %c0_18 = arith.constant 0 : index
    %61 = vector.load %arg4[%c8, %c0_18] : memref<32x32xbf16, #tpu.memory_space<vmem>>, vector<8x32xbf16>
    %cst_19 = arith.constant dense<0.000000e+00> : vector<8x32xf32>
    %62 = tpu.matmul %60, %61, %cst_19 {dimension_numbers = #tpu.dot_dimension_numbers<[1], [0], [0], [1], [0, 0, 1, 1], [], []>} : vector<8x8xbf16>, vector<8x32xbf16>, vector<8x32xf32> -> vector<8x32xf32>
    %63 = arith.addf %41, %62 : vector<8x32xf32>
    %64 = vector.extract_strided_slice %6 {offsets = [0, 16], sizes = [8, 8], strides = [1, 1]} : vector<8x32xbf16> to vector<8x8xbf16>
    %65 = vector.extract_strided_slice %8 {offsets = [0, 16], sizes = [8, 8], strides = [1, 1]} : vector<8x32xbf16> to vector<8x8xbf16>
    %66 = vector.extract_strided_slice %10 {offsets = [0, 16], sizes = [8, 8], strides = [1, 1]} : vector<8x32xbf16> to vector<8x8xbf16>
    %cst_20 = arith.constant dense<0.000000e+00> : vector<8x8xf32>
    %67 = tpu.matmul %64, %65, %cst_20 {dimension_numbers = #tpu.dot_dimension_numbers<[1], [1], [0], [0], [0, 0, 1, 0], [], []>} : vector<8x8xbf16>, vector<8x8xbf16>, vector<8x8xf32> -> vector<8x8xf32>
    %68 = vector.broadcast %18 : vector<1x8xf32> to vector<8x8xf32>
    %69 = arith.addf %67, %68 : vector<8x8xf32>
    %cst_21 = arith.constant dense<0xFF800000> : vector<8xf32>
    %70 = vector.multi_reduction <maximumf>, %69, %cst_21 [1] : vector<8x8xf32> to vector<8xf32>
    %71 = vector.shape_cast %70 : vector<8xf32> to vector<8x1xf32>
    %72 = vector.broadcast %71 : vector<8x1xf32> to vector<8x8xf32>
    %73 = arith.subf %69, %72 : vector<8x8xf32>
    %74 = math.exp %73 : vector<8x8xf32>
    %cst_22 = arith.constant dense<0.000000e+00> : vector<8xf32>
    %75 = vector.multi_reduction <add>, %74, %cst_22 [1] : vector<8x8xf32> to vector<8xf32>
    %76 = vector.shape_cast %75 : vector<8xf32> to vector<8x1xf32>
    %77 = tpu.reciprocal %76 {approx = true} : vector<8x1xf32> -> vector<8x1xf32>
    %78 = vector.broadcast %77 : vector<8x1xf32> to vector<8x8xf32>
    %79 = arith.mulf %74, %78 : vector<8x8xf32>
    %80 = arith.truncf %79 : vector<8x8xf32> to vector<8x8xbf16>
    %cst_23 = arith.constant dense<0.000000e+00> : vector<8x8xf32>
    %81 = tpu.matmul %80, %66, %cst_23 {dimension_numbers = #tpu.dot_dimension_numbers<[1], [0], [0], [1], [0, 0, 1, 1], [], []>} : vector<8x8xbf16>, vector<8x8xbf16>, vector<8x8xf32> -> vector<8x8xf32>
    %82 = arith.truncf %81 : vector<8x8xf32> to vector<8x8xbf16>
    %c16 = arith.constant 16 : index
    %c0_24 = arith.constant 0 : index
    %83 = vector.load %arg4[%c16, %c0_24] : memref<32x32xbf16, #tpu.memory_space<vmem>>, vector<8x32xbf16>
    %cst_25 = arith.constant dense<0.000000e+00> : vector<8x32xf32>
    %84 = tpu.matmul %82, %83, %cst_25 {dimension_numbers = #tpu.dot_dimension_numbers<[1], [0], [0], [1], [0, 0, 1, 1], [], []>} : vector<8x8xbf16>, vector<8x32xbf16>, vector<8x32xf32> -> vector<8x32xf32>
    %85 = arith.addf %63, %84 : vector<8x32xf32>
    %86 = vector.extract_strided_slice %6 {offsets = [0, 24], sizes = [8, 8], strides = [1, 1]} : vector<8x32xbf16> to vector<8x8xbf16>
    %87 = vector.extract_strided_slice %8 {offsets = [0, 24], sizes = [8, 8], strides = [1, 1]} : vector<8x32xbf16> to vector<8x8xbf16>
    %88 = vector.extract_strided_slice %10 {offsets = [0, 24], sizes = [8, 8], strides = [1, 1]} : vector<8x32xbf16> to vector<8x8xbf16>
    %cst_26 = arith.constant dense<0.000000e+00> : vector<8x8xf32>
    %89 = tpu.matmul %86, %87, %cst_26 {dimension_numbers = #tpu.dot_dimension_numbers<[1], [1], [0], [0], [0, 0, 1, 0], [], []>} : vector<8x8xbf16>, vector<8x8xbf16>, vector<8x8xf32> -> vector<8x8xf32>
    %90 = vector.broadcast %18 : vector<1x8xf32> to vector<8x8xf32>
    %91 = arith.addf %89, %90 : vector<8x8xf32>
    %cst_27 = arith.constant dense<0xFF800000> : vector<8xf32>
    %92 = vector.multi_reduction <maximumf>, %91, %cst_27 [1] : vector<8x8xf32> to vector<8xf32>
    %93 = vector.shape_cast %92 : vector<8xf32> to vector<8x1xf32>
    %94 = vector.broadcast %93 : vector<8x1xf32> to vector<8x8xf32>
    %95 = arith.subf %91, %94 : vector<8x8xf32>
    %96 = math.exp %95 : vector<8x8xf32>
    %cst_28 = arith.constant dense<0.000000e+00> : vector<8xf32>
    %97 = vector.multi_reduction <add>, %96, %cst_28 [1] : vector<8x8xf32> to vector<8xf32>
    %98 = vector.shape_cast %97 : vector<8xf32> to vector<8x1xf32>
    %99 = tpu.reciprocal %98 {approx = true} : vector<8x1xf32> -> vector<8x1xf32>
    %100 = vector.broadcast %99 : vector<8x1xf32> to vector<8x8xf32>
    %101 = arith.mulf %96, %100 : vector<8x8xf32>
    %102 = arith.truncf %101 : vector<8x8xf32> to vector<8x8xbf16>
    %cst_29 = arith.constant dense<0.000000e+00> : vector<8x8xf32>
    %103 = tpu.matmul %102, %88, %cst_29 {dimension_numbers = #tpu.dot_dimension_numbers<[1], [0], [0], [1], [0, 0, 1, 1], [], []>} : vector<8x8xbf16>, vector<8x8xbf16>, vector<8x8xf32> -> vector<8x8xf32>
    %104 = arith.truncf %103 : vector<8x8xf32> to vector<8x8xbf16>
    %c24 = arith.constant 24 : index
    %c0_30 = arith.constant 0 : index
    %105 = vector.load %arg4[%c24, %c0_30] : memref<32x32xbf16, #tpu.memory_space<vmem>>, vector<8x32xbf16>
    %cst_31 = arith.constant dense<0.000000e+00> : vector<8x32xf32>
    %106 = tpu.matmul %104, %105, %cst_31 {dimension_numbers = #tpu.dot_dimension_numbers<[1], [0], [0], [1], [0, 0, 1, 1], [], []>} : vector<8x8xbf16>, vector<8x32xbf16>, vector<8x32xf32> -> vector<8x32xf32>
    %107 = arith.addf %85, %106 : vector<8x32xf32>
    %108 = arith.addf %1, %107 : vector<8x32xf32>
    %c0_32 = arith.constant 0 : index
    %c0_33 = arith.constant 0 : index
    %109 = vector.load %arg9[%c0_32, %c0_33] : memref<1x32xf32, #tpu.memory_space<vmem>>, vector<1x32xf32>
    %110 = vector.shape_cast %109 : vector<1x32xf32> to vector<32xf32>
    %c0_34 = arith.constant 0 : index
    %c0_35 = arith.constant 0 : index
    %111 = vector.load %arg10[%c0_34, %c0_35] : memref<1x32xf32, #tpu.memory_space<vmem>>, vector<1x32xf32>
    %112 = vector.shape_cast %111 : vector<1x32xf32> to vector<32xf32>
    %cst_36 = arith.constant dense<0.000000e+00> : vector<8xf32>
    %113 = vector.multi_reduction <add>, %108, %cst_36 [1] : vector<8x32xf32> to vector<8xf32>
    %114 = vector.shape_cast %113 : vector<8xf32> to vector<8x1xf32>
    %cst_37 = arith.constant 3.200000e+01 : f32
    %115 = vector.broadcast %cst_37 : f32 to vector<8x1xf32>
    %116 = arith.divf %114, %115 : vector<8x1xf32>
    %117 = vector.broadcast %116 : vector<8x1xf32> to vector<8x32xf32>
    %118 = arith.subf %108, %117 : vector<8x32xf32>
    %119 = arith.mulf %118, %118 : vector<8x32xf32>
    %cst_38 = arith.constant dense<0.000000e+00> : vector<8xf32>
    %120 = vector.multi_reduction <add>, %119, %cst_38 [1] : vector<8x32xf32> to vector<8xf32>
    %121 = vector.shape_cast %120 : vector<8xf32> to vector<8x1xf32>
    %cst_39 = arith.constant 3.200000e+01 : f32
    %122 = vector.broadcast %cst_39 : f32 to vector<8x1xf32>
    %123 = arith.divf %121, %122 : vector<8x1xf32>
    %124 = vector.broadcast %116 : vector<8x1xf32> to vector<8x32xf32>
    %125 = arith.subf %108, %124 : vector<8x32xf32>
    %cst_40 = arith.constant 9.99999974E-6 : f32
    %126 = vector.broadcast %cst_40 : f32 to vector<8x1xf32>
    %127 = arith.addf %123, %126 : vector<8x1xf32>
    %128 = math.rsqrt %127 : vector<8x1xf32>
    %129 = vector.broadcast %128 : vector<8x1xf32> to vector<8x32xf32>
    %130 = arith.mulf %125, %129 : vector<8x32xf32>
    %131 = vector.shape_cast %110 : vector<32xf32> to vector<1x32xf32>
    %132 = vector.broadcast %131 : vector<1x32xf32> to vector<8x32xf32>
    %133 = arith.mulf %130, %132 : vector<8x32xf32>
    %134 = vector.shape_cast %112 : vector<32xf32> to vector<1x32xf32>
    %135 = vector.broadcast %134 : vector<1x32xf32> to vector<8x32xf32>
    %136 = arith.addf %133, %135 : vector<8x32xf32>
    %137 = arith.truncf %136 : vector<8x32xf32> to vector<8x32xbf16>
    %c0_41 = arith.constant 0 : index
    %c0_42 = arith.constant 0 : index
    %138 = vector.load %arg5[%c0_41, %c0_42] : memref<32x64xbf16, #tpu.memory_space<vmem>>, vector<32x64xbf16>
    %cst_43 = arith.constant dense<0.000000e+00> : vector<8x64xf32>
    %139 = tpu.matmul %137, %138, %cst_43 {dimension_numbers = #tpu.dot_dimension_numbers<[1], [0], [0], [1], [0, 0, 1, 1], [], []>} : vector<8x32xbf16>, vector<32x64xbf16>, vector<8x64xf32> -> vector<8x64xf32>
    %c0_44 = arith.constant 0 : index
    %c0_45 = arith.constant 0 : index
    %140 = vector.load %arg7[%c0_44, %c0_45] : memref<1x64xf32, #tpu.memory_space<vmem>>, vector<1x64xf32>
    %141 = vector.shape_cast %140 : vector<1x64xf32> to vector<64xf32>
    %142 = vector.shape_cast %141 : vector<64xf32> to vector<1x64xf32>
    %143 = vector.broadcast %142 : vector<1x64xf32> to vector<8x64xf32>
    %144 = arith.addf %139, %143 : vector<8x64xf32>
    %cst_46 = arith.constant 0.000000e+00 : f32
    %145 = vector.broadcast %cst_46 : f32 to vector<8x64xf32>
    %146 = arith.maximumf %144, %145 : vector<8x64xf32>
    %147 = arith.truncf %146 : vector<8x64xf32> to vector<8x64xbf16>
    %c0_47 = arith.constant 0 : index
    %c0_48 = arith.constant 0 : index
    %148 = vector.load %arg6[%c0_47, %c0_48] : memref<64x32xbf16, #tpu.memory_space<vmem>>, vector<64x32xbf16>
    %cst_49 = arith.constant dense<0.000000e+00> : vector<8x32xf32>
    %149 = tpu.matmul %147, %148, %cst_49 {dimension_numbers = #tpu.dot_dimension_numbers<[1], [0], [0], [1], [0, 0, 1, 1], [], []>} : vector<8x64xbf16>, vector<64x32xbf16>, vector<8x32xf32> -> vector<8x32xf32>
    %c0_50 = arith.constant 0 : index
    %c0_51 = arith.constant 0 : index
    %150 = vector.load %arg8[%c0_50, %c0_51] : memref<1x32xf32, #tpu.memory_space<vmem>>, vector<1x32xf32>
    %151 = vector.shape_cast %150 : vector<1x32xf32> to vector<32xf32>
    %152 = vector.shape_cast %151 : vector<32xf32> to vector<1x32xf32>
    %153 = vector.broadcast %152 : vector<1x32xf32> to vector<8x32xf32>
    %154 = arith.addf %149, %153 : vector<8x32xf32>
    %155 = arith.addf %136, %154 : vector<8x32xf32>
    %c0_52 = arith.constant 0 : index
    %c0_53 = arith.constant 0 : index
    %156 = vector.load %arg11[%c0_52, %c0_53] : memref<1x32xf32, #tpu.memory_space<vmem>>, vector<1x32xf32>
    %157 = vector.shape_cast %156 : vector<1x32xf32> to vector<32xf32>
    %c0_54 = arith.constant 0 : index
    %c0_55 = arith.constant 0 : index
    %158 = vector.load %arg12[%c0_54, %c0_55] : memref<1x32xf32, #tpu.memory_space<vmem>>, vector<1x32xf32>
    %159 = vector.shape_cast %158 : vector<1x32xf32> to vector<32xf32>
    %cst_56 = arith.constant dense<0.000000e+00> : vector<8xf32>
    %160 = vector.multi_reduction <add>, %155, %cst_56 [1] : vector<8x32xf32> to vector<8xf32>
    %161 = vector.shape_cast %160 : vector<8xf32> to vector<8x1xf32>
    %cst_57 = arith.constant 3.200000e+01 : f32
    %162 = vector.broadcast %cst_57 : f32 to vector<8x1xf32>
    %163 = arith.divf %161, %162 : vector<8x1xf32>
    %164 = vector.broadcast %163 : vector<8x1xf32> to vector<8x32xf32>
    %165 = arith.subf %155, %164 : vector<8x32xf32>
    %166 = arith.mulf %165, %165 : vector<8x32xf32>
    %cst_58 = arith.constant dense<0.000000e+00> : vector<8xf32>
    %167 = vector.multi_reduction <add>, %166, %cst_58 [1] : vector<8x32xf32> to vector<8xf32>
    %168 = vector.shape_cast %167 : vector<8xf32> to vector<8x1xf32>
    %cst_59 = arith.constant 3.200000e+01 : f32
    %169 = vector.broadcast %cst_59 : f32 to vector<8x1xf32>
    %170 = arith.divf %168, %169 : vector<8x1xf32>
    %171 = vector.broadcast %163 : vector<8x1xf32> to vector<8x32xf32>
    %172 = arith.subf %155, %171 : vector<8x32xf32>
    %cst_60 = arith.constant 9.99999974E-6 : f32
    %173 = vector.broadcast %cst_60 : f32 to vector<8x1xf32>
    %174 = arith.addf %170, %173 : vector<8x1xf32>
    %175 = math.rsqrt %174 : vector<8x1xf32>
    %176 = vector.broadcast %175 : vector<8x1xf32> to vector<8x32xf32>
    %177 = arith.mulf %172, %176 : vector<8x32xf32>
    %178 = vector.shape_cast %157 : vector<32xf32> to vector<1x32xf32>
    %179 = vector.broadcast %178 : vector<1x32xf32> to vector<8x32xf32>
    %180 = arith.mulf %177, %179 : vector<8x32xf32>
    %181 = vector.shape_cast %159 : vector<32xf32> to vector<1x32xf32>
    %182 = vector.broadcast %181 : vector<1x32xf32> to vector<8x32xf32>
    %183 = arith.addf %180, %182 : vector<8x32xf32>
    %c0_61 = arith.constant 0 : index
    %c0_62 = arith.constant 0 : index
    %c0_63 = arith.constant 0 : index
    %184 = vector.load %arg13[%c0_61, %c0_62, %c0_63] : memref<1x8x32xf32, #tpu.memory_space<vmem>>, vector<1x8x32xf32>
    %185 = vector.shape_cast %184 : vector<1x8x32xf32> to vector<8x32xf32>
    %186 = vector.shape_cast %183 : vector<8x32xf32> to vector<1x8x32xf32>
    tpu.vector_store %arg13[%c0_61, %c0_62, %c0_63], %186 {strides = array<i32>} : memref<1x8x32xf32, #tpu.memory_space<vmem>>, vector<1x8x32xf32>,
    return
  }
  func.func @transform_0(%arg0: i32, %arg1: memref<2xi32, #tpu.memory_space<smem>>) -> (i32, i32, i32) {
    %c0_i32 = arith.constant 0 : i32
    %c0_i32_0 = arith.constant 0 : i32
    %c0_i32_1 = arith.constant 0 : i32
    return %arg0, %c0_i32, %c0_i32_0 : i32, i32, i32
  }
  func.func @transform_1(%arg0: i32, %arg1: memref<2xi32, #tpu.memory_space<smem>>) -> (i32, i32) {
    %c0_i32 = arith.constant 0 : i32
    %c0_i32_0 = arith.constant 0 : i32
    %c0_i32_1 = arith.constant 0 : i32
    return %c0_i32, %c0_i32_0 : i32, i32
  }
  func.func @transform_2(%arg0: i32, %arg1: memref<2xi32, #tpu.memory_space<smem>>) -> (i32, i32) {
    %c0_i32 = arith.constant 0 : i32
    %c0_i32_0 = arith.constant 0 : i32
    %c0_i32_1 = arith.constant 0 : i32
    return %c0_i32, %c0_i32_0 : i32, i32
  }
  func.func @transform_3(%arg0: i32, %arg1: memref<2xi32, #tpu.memory_space<smem>>) -> (i32, i32) {
    %c0_i32 = arith.constant 0 : i32
    %c0_i32_0 = arith.constant 0 : i32
    %c0_i32_1 = arith.constant 0 : i32
    return %c0_i32, %c0_i32_0 : i32, i32
  }
  func.func @transform_4(%arg0: i32, %arg1: memref<2xi32, #tpu.memory_space<smem>>) -> (i32, i32) {
    %c0_i32 = arith.constant 0 : i32
    %c0_i32_0 = arith.constant 0 : i32
    %c0_i32_1 = arith.constant 0 : i32
    return %c0_i32, %c0_i32_0 : i32, i32
  }
  func.func @transform_5(%arg0: i32, %arg1: memref<2xi32, #tpu.memory_space<smem>>) -> (i32, i32) {
    %c0_i32 = arith.constant 0 : i32
    %c0_i32_0 = arith.constant 0 : i32
    %c0_i32_1 = arith.constant 0 : i32
    return %c0_i32, %c0_i32_0 : i32, i32
  }
  func.func @transform_6(%arg0: i32, %arg1: memref<2xi32, #tpu.memory_space<smem>>) -> (i32, i32) {
    %c0_i32 = arith.constant 0 : i32
    %c0_i32_0 = arith.constant 0 : i32
    %c0_i32_1 = arith.constant 0 : i32
    return %c0_i32, %c0_i32_0 : i32, i32
  }
  func.func @transform_7(%arg0: i32, %arg1: memref<2xi32, #tpu.memory_space<smem>>) -> (i32, i32) {
    %c0_i32 = arith.constant 0 : i32
    %c0_i32_0 = arith.constant 0 : i32
    %c0_i32_1 = arith.constant 0 : i32
    return %c0_i32, %c0_i32_0 : i32, i32
  }
  func.func @transform_8(%arg0: i32, %arg1: memref<2xi32, #tpu.memory_space<smem>>) -> (i32, i32) {
    %c0_i32 = arith.constant 0 : i32
    %c0_i32_0 = arith.constant 0 : i32
    %c0_i32_1 = arith.constant 0 : i32
    return %c0_i32, %c0_i32_0 : i32, i32
  }
  func.func @transform_9(%arg0: i32, %arg1: memref<2xi32, #tpu.memory_space<smem>>) -> (i32, i32) {
    %c0_i32 = arith.constant 0 : i32
    %c0_i32_0 = arith.constant 0 : i32
    %c0_i32_1 = arith.constant 0 : i32
    return %c0_i32, %c0_i32_0 : i32, i32
  }
  func.func @transform_10(%arg0: i32, %arg1: memref<2xi32, #tpu.memory_space<smem>>) -> (i32, i32) {
    %c0_i32 = arith.constant 0 : i32
    %c0_i32_0 = arith.constant 0 : i32
    %c0_i32_1 = arith.constant 0 : i32
    return %c0_i32, %c0_i32_0 : i32, i32
  }
  func.func @transform_11(%arg0: i32, %arg1: memref<2xi32, #tpu.memory_space<smem>>) -> (i32, i32, i32) {
    %c0_i32 = arith.constant 0 : i32
    %c0_i32_0 = arith.constant 0 : i32
    %c0_i32_1 = arith.constant 0 : i32
    return %arg0, %c0_i32, %c0_i32_0 : i32, i32, i32
  }
}

</mosaic_0001>

<llo_original>
// kernel: tpu_custom_call.1
$region0: #{tpu_custom_call.1}
  #allocation0 [shape = 'u32[]', space=smem, size = 0x4, offset = 0x4, fixed_abs, tag = 'smem constant byte address 0x4 - core index']
  #allocation1 [shape = 'u32[144,128]{1,0:T(1,128)}', space=vmem, size = 0x12000, scoped, tag = 'internal scratch']
  #allocation2 [shape = 's32[1]{0}', space=sflag, size = 0x4, scoped, tag = 'scoped memory for tpu_custom_call.1']
  #allocation3 [shape = 'u8[512]{0}', space=smem, size = 0x200, scoped, tag = 'prefetched SMEM operand 0']
  %s0 = inlined_call_operand.hbm [shape: s32[2], index: 0, kind: input, shape index: {}]
  %s1 = inlined_call_operand.hbm [shape: f32[2,8,32], index: 1, kind: input, shape index: {}]
  %s2 = inlined_call_operand.hbm [shape: bf16[32,96], index: 2, kind: input, shape index: {}]
  %s3 = inlined_call_operand.hbm [shape: bf16[32,32], index: 3, kind: input, shape index: {}]
  %s4 = inlined_call_operand.hbm [shape: bf16[32,64], index: 4, kind: input, shape index: {}]
  %s5 = inlined_call_operand.hbm [shape: bf16[64,32], index: 5, kind: input, shape index: {}]
  %s6 = inlined_call_operand.hbm [shape: f32[1,64], index: 6, kind: input, shape index: {}]
  %s7 = inlined_call_operand.hbm [shape: f32[1,32], index: 7, kind: input, shape index: {}]
  %s8 = inlined_call_operand.hbm [shape: f32[1,32], index: 8, kind: input, shape index: {}]
  %s9 = inlined_call_operand.hbm [shape: f32[1,32], index: 9, kind: input, shape index: {}]
  %s10 = inlined_call_operand.hbm [shape: f32[1,32], index: 10, kind: input, shape index: {}]
  %s11 = inlined_call_operand.hbm [shape: f32[1,32], index: 11, kind: input, shape index: {}]
  %s12 = inlined_call_operand.hbm [shape: f32[2,8,32], index: 12, kind: output, shape index: {}]
  %s13 = sld [smem:[#allocation0]]
  $region121: #{tpu_custom_call.1} parent=0
    _
  %s15 = ssub.s32 1, %s13
  %s16 = scalar_select 0, %s15, %s13
  %18 = dma.hbm_to_smem %s0, 16, [#allocation3], [#allocation2]
  %19 = dma.done [#allocation2], 16
  %20 = sfence
  $region1: #{tpu_custom_call.1} parent=0
    #allocation4 [shape = 'u8[8192]{0}', space=vmem, size = 0x2000, scoped, tag = 'input window, operand 1']
    #allocation5 [shape = 's32[2]{0}', space=sflag, size = 0x8, scoped, tag = 'scoped memory for tpu_custom_call.1']
    #allocation6 [shape = 's32[2]{0}', space=sflag, size = 0x8, scoped, tag = 'scoped memory for tpu_custom_call.1']
    #allocation7 [shape = 'u8[8192]{0}', space=vmem, size = 0x2000, scoped, tag = 'input window, operand 2, single buffered']
    #allocation8 [shape = 's32[1]{0}', space=sflag, size = 0x4, scoped, tag = 'scoped memory for tpu_custom_call.1']
    #allocation9 [shape = 'u8[8192]{0}', space=vmem, size = 0x2000, scoped, tag = 'input window, operand 3, single buffered']
    #allocation10 [shape = 'u8[8192]{0}', space=vmem, size = 0x2000, scoped, tag = 'input window, operand 4, single buffered']
    #allocation11 [shape = 's32[1]{0}', space=sflag, size = 0x4, scoped, tag = 'scoped memory for tpu_custom_call.1']
    #allocation12 [shape = 'u8[16384]{0}', space=vmem, size = 0x4000, scoped, tag = 'input window, operand 5, single buffered']
    #allocation13 [shape = 'u8[512]{0}', space=vmem, size = 0x400, scoped, tag = 'input window, operand 6, single buffered']
    #allocation14 [shape = 's32[1]{0}', space=sflag, size = 0x4, scoped, tag = 'scoped memory for tpu_custom_call.1']
    #allocation15 [shape = 'u8[512]{0}', space=vmem, size = 0x400, scoped, tag = 'input window, operand 7, single buffered']
    #allocation16 [shape = 'u8[512]{0}', space=vmem, size = 0x400, scoped, tag = 'input window, operand 8, single buffered']
    #allocation17 [shape = 's32[1]{0}', space=sflag, size = 0x4, scoped, tag = 'scoped memory for tpu_custom_call.1']
    #allocation18 [shape = 'u8[512]{0}', space=vmem, size = 0x400, scoped, tag = 'input window, operand 9, single buffered']
    #allocation19 [shape = 'u8[512]{0}', space=vmem, size = 0x400, scoped, tag = 'input window, operand 10, single buffered']
    #allocation20 [shape = 's32[1]{0}', space=sflag, size = 0x4, scoped, tag = 'scoped memory for tpu_custom_call.1']
    #allocation21 [shape = 'u8[512]{0}', space=vmem, size = 0x400, scoped, tag = 'input window, operand 11, single buffered']
    #allocation22 [shape = 'u8[8192]{0}', space=vmem, size = 0x2000, scoped, tag = 'output window, operand 0']
    %21 = vsyncpa [#allocation5], 0
    %s22 = scalar_lea.sflag [#allocation5], 1
    %23 = vsyncpa %s22, 0
    %24 = vsyncpa [#allocation8], 0
    %25 = vsyncpa [#allocation11], 0
    %26 = vsyncpa [#allocation14], 0
    %27 = vsyncpa [#allocation17], 0
    %28 = vsyncpa [#allocation20], 0
    %29 = vsyncpa [#allocation6], 0
    %s30 = scalar_lea.sflag [#allocation6], 1
    %31 = vsyncpa %s30, 0
    loop: start=0, step=1, limit=4
    $region2: #{tpu_custom_call.1} parent=1 // loop_pre_header
      _
    $region3: #{tpu_custom_call.1} parent=1 // loop_header
      %s33 = sphi 0, %s37
      %p34 = scmp.ge.s32.totalorder %s33, 4
      %s43 = sphi 0, %s45
      %s46 = sphi 0, %s43
      %s47 = sphi 0, %s46
      %s63 = sphi 0, %s47
      %s67 = sphi 0, %s67
      %s69 = sphi 0, %s67
      %s70 = sphi 0, %s69
      %s84 = sphi 0, %s70
      %s88 = sphi 0, %s88
      %s90 = sphi 0, %s88
      %s91 = sphi 0, %s90
      %s105 = sphi 0, %s91
      %s109 = sphi 0, %s109
      %s111 = sphi 0, %s109
      %s112 = sphi 0, %s111
      %s126 = sphi 0, %s112
      %s130 = sphi 0, %s130
      %s132 = sphi 0, %s130
      %s133 = sphi 0, %s132
      %s147 = sphi 0, %s133
      %s151 = sphi 0, %s151
      %s153 = sphi 0, %s151
      %s154 = sphi 0, %s153
      %s168 = sphi 0, %s154
      %s172 = sphi 0, %s172
      %s174 = sphi 0, %s172
      %s175 = sphi 0, %s174
      %s189 = sphi 0, %s175
      %s193 = sphi 0, %s193
      %s195 = sphi 0, %s193
      %s196 = sphi 0, %s195
      %s210 = sphi 0, %s196
      %s214 = sphi 0, %s214
      %s216 = sphi 0, %s214
      %s217 = sphi 0, %s216
      %s231 = sphi 0, %s217
      %s235 = sphi 0, %s235
      %s237 = sphi 0, %s235
      %s238 = sphi 0, %s237
      %s252 = sphi 0, %s238
      %s256 = sphi 0, %s256
      %s258 = sphi 0, %s256
      %s259 = sphi 0, %s258
      %s273 = sphi 0, %s259
      %s279 = sphi 0, %s281
      %s282 = sphi 0, %s279
      %s283 = sphi 0, %s282
      %s299 = sphi 0, %s283
    $region4: #{tpu_custom_call.1} parent=1 // loop_header_branch
      %36 = sbr.rel (%p34) target = $region8
    $region5: #{tpu_custom_call.1} parent=1 // loop_body
      %s38 = ssub.s32 %s33, 1
      %s39 = ssub.s32 %s33, 2
      %s40 = sadd.s32 %s33, 1
      %s41 = ssub.s32 %s33, %s40
      %p42 = scmp.eq.s32.totalorder %s41, 0
      %s44 = sadd.s32 %s43, 1
      %s45 = scalar_select %p42, %s43, %s44
      %p48 = pneg %p42
      %p49 = scmp.eq.s32.totalorder %s33, 1
      %p50 = por %p48, %p49
      %p51 = scmp.ne.s32.totalorder %s43, %s46
      %p52 = scmp.eq.s32.totalorder %s33, 0
      %p53 = por %p51, %p52
      %p54 = scmp.ne.s32.totalorder %s43, %s46
      %p55 = scmp.eq.s32.totalorder %s38, 1
      %p56 = por %p54, %p55
      %p57 = scmp.ne.s32.totalorder %s46, %s47
      %p58 = scmp.eq.s32.totalorder %s38, 0
      %p59 = por %p57, %p58
      %p60 = scmp.ne.s32.totalorder %s46, %s47
      %p61 = scmp.eq.s32.totalorder %s39, 1
      %p62 = por %p60, %p61
      %p64 = scmp.ne.s32.totalorder %s47, %s63
      %p65 = scmp.eq.s32.totalorder %s39, 0
      %p66 = por %p64, %p65
      %s68 = sadd.s32 %s67, 1
      %p71 = scmp.eq.s32.totalorder %s33, 1
      %p72 = scmp.ne.s32.totalorder %s67, %s69
      %p73 = scmp.eq.s32.totalorder %s33, 0
      %p74 = por %p72, %p73
      %p75 = scmp.ne.s32.totalorder %s67, %s69
      %p76 = scmp.eq.s32.totalorder %s38, 1
      %p77 = por %p75, %p76
      %p78 = scmp.ne.s32.totalorder %s69, %s70
      %p79 = scmp.eq.s32.totalorder %s38, 0
      %p80 = por %p78, %p79
      %p81 = scmp.ne.s32.totalorder %s69, %s70
      %p82 = scmp.eq.s32.totalorder %s39, 1
      %p83 = por %p81, %p82
      %p85 = scmp.ne.s32.totalorder %s70, %s84
      %p86 = scmp.eq.s32.totalorder %s39, 0
      %p87 = por %p85, %p86
      %s89 = sadd.s32 %s88, 1
      %p92 = scmp.eq.s32.totalorder %s33, 1
      %p93 = scmp.ne.s32.totalorder %s88, %s90
      %p94 = scmp.eq.s32.totalorder %s33, 0
      %p95 = por %p93, %p94
      %p96 = scmp.ne.s32.totalorder %s88, %s90
      %p97 = scmp.eq.s32.totalorder %s38, 1
      %p98 = por %p96, %p97
      %p99 = scmp.ne.s32.totalorder %s90, %s91
      %p100 = scmp.eq.s32.totalorder %s38, 0
      %p101 = por %p99, %p100
      %p102 = scmp.ne.s32.totalorder %s90, %s91
      %p103 = scmp.eq.s32.totalorder %s39, 1
      %p104 = por %p102, %p103
      %p106 = scmp.ne.s32.totalorder %s91, %s105
      %p107 = scmp.eq.s32.totalorder %s39, 0
      %p108 = por %p106, %p107
      %s110 = sadd.s32 %s109, 1
      %p113 = scmp.eq.s32.totalorder %s33, 1
      %p114 = scmp.ne.s32.totalorder %s109, %s111
      %p115 = scmp.eq.s32.totalorder %s33, 0
      %p116 = por %p114, %p115
      %p117 = scmp.ne.s32.totalorder %s109, %s111
      %p118 = scmp.eq.s32.totalorder %s38, 1
      %p119 = por %p117, %p118
      %p120 = scmp.ne.s32.totalorder %s111, %s112
      %p121 = scmp.eq.s32.totalorder %s38, 0
      %p122 = por %p120, %p121
      %p123 = scmp.ne.s32.totalorder %s111, %s112
      %p124 = scmp.eq.s32.totalorder %s39, 1
      %p125 = por %p123, %p124
      %p127 = scmp.ne.s32.totalorder %s112, %s126
      %p128 = scmp.eq.s32.totalorder %s39, 0
      %p129 = por %p127, %p128
      %s131 = sadd.s32 %s130, 1
      %p134 = scmp.eq.s32.totalorder %s33, 1
      %p135 = scmp.ne.s32.totalorder %s130, %s132
      %p136 = scmp.eq.s32.totalorder %s33, 0
      %p137 = por %p135, %p136
      %p138 = scmp.ne.s32.totalorder %s130, %s132
      %p139 = scmp.eq.s32.totalorder %s38, 1
      %p140 = por %p138, %p139
      %p141 = scmp.ne.s32.totalorder %s132, %s133
      %p142 = scmp.eq.s32.totalorder %s38, 0
      %p143 = por %p141, %p142
      %p144 = scmp.ne.s32.totalorder %s132, %s133
      %p145 = scmp.eq.s32.totalorder %s39, 1
      %p146 = por %p144, %p145
      %p148 = scmp.ne.s32.totalorder %s133, %s147
      %p149 = scmp.eq.s32.totalorder %s39, 0
      %p150 = por %p148, %p149
      %s152 = sadd.s32 %s151, 1
      %p155 = scmp.eq.s32.totalorder %s33, 1
      %p156 = scmp.ne.s32.totalorder %s151, %s153
      %p157 = scmp.eq.s32.totalorder %s33, 0
      %p158 = por %p156, %p157
      %p159 = scmp.ne.s32.totalorder %s151, %s153
      %p160 = scmp.eq.s32.totalorder %s38, 1
      %p161 = por %p159, %p160
      %p162 = scmp.ne.s32.totalorder %s153, %s154
      %p163 = scmp.eq.s32.totalorder %s38, 0
      %p164 = por %p162, %p163
      %p165 = scmp.ne.s32.totalorder %s153, %s154
      %p166 = scmp.eq.s32.totalorder %s39, 1
      %p167 = por %p165, %p166
      %p169 = scmp.ne.s32.totalorder %s154, %s168
      %p170 = scmp.eq.s32.totalorder %s39, 0
      %p171 = por %p169, %p170
      %s173 = sadd.s32 %s172, 1
      %p176 = scmp.eq.s32.totalorder %s33, 1
      %p177 = scmp.ne.s32.totalorder %s172, %s174
      %p178 = scmp.eq.s32.totalorder %s33, 0
      %p179 = por %p177, %p178
      %p180 = scmp.ne.s32.totalorder %s172, %s174
      %p181 = scmp.eq.s32.totalorder %s38, 1
      %p182 = por %p180, %p181
      %p183 = scmp.ne.s32.totalorder %s174, %s175
      %p184 = scmp.eq.s32.totalorder %s38, 0
      %p185 = por %p183, %p184
      %p186 = scmp.ne.s32.totalorder %s174, %s175
      %p187 = scmp.eq.s32.totalorder %s39, 1
      %p188 = por %p186, %p187
      %p190 = scmp.ne.s32.totalorder %s175, %s189
      %p191 = scmp.eq.s32.totalorder %s39, 0
      %p192 = por %p190, %p191
      %s194 = sadd.s32 %s193, 1
      %p197 = scmp.eq.s32.totalorder %s33, 1
      %p198 = scmp.ne.s32.totalorder %s193, %s195
      %p199 = scmp.eq.s32.totalorder %s33, 0
      %p200 = por %p198, %p199
      %p201 = scmp.ne.s32.totalorder %s193, %s195
      %p202 = scmp.eq.s32.totalorder %s38, 1
      %p203 = por %p201, %p202
      %p204 = scmp.ne.s32.totalorder %s195, %s196
      %p205 = scmp.eq.s32.totalorder %s38, 0
      %p206 = por %p204, %p205
      %p207 = scmp.ne.s32.totalorder %s195, %s196
      %p208 = scmp.eq.s32.totalorder %s39, 1
      %p209 = por %p207, %p208
      %p211 = scmp.ne.s32.totalorder %s196, %s210
      %p212 = scmp.eq.s32.totalorder %s39, 0
      %p213 = por %p211, %p212
      %s215 = sadd.s32 %s214, 1
      %p218 = scmp.eq.s32.totalorder %s33, 1
      %p219 = scmp.ne.s32.totalorder %s214, %s216
      %p220 = scmp.eq.s32.totalorder %s33, 0
      %p221 = por %p219, %p220
      %p222 = scmp.ne.s32.totalorder %s214, %s216
      %p223 = scmp.eq.s32.totalorder %s38, 1
      %p224 = por %p222, %p223
      %p225 = scmp.ne.s32.totalorder %s216, %s217
      %p226 = scmp.eq.s32.totalorder %s38, 0
      %p227 = por %p225, %p226
      %p228 = scmp.ne.s32.totalorder %s216, %s217
      %p229 = scmp.eq.s32.totalorder %s39, 1
      %p230 = por %p228, %p229
      %p232 = scmp.ne.s32.totalorder %s217, %s231
      %p233 = scmp.eq.s32.totalorder %s39, 0
      %p234 = por %p232, %p233
      %s236 = sadd.s32 %s235, 1
      %p239 = scmp.eq.s32.totalorder %s33, 1
      %p240 = scmp.ne.s32.totalorder %s235, %s237
      %p241 = scmp.eq.s32.totalorder %s33, 0
      %p242 = por %p240, %p241
      %p243 = scmp.ne.s32.totalorder %s235, %s237
      %p244 = scmp.eq.s32.totalorder %s38, 1
      %p245 = por %p243, %p244
      %p246 = scmp.ne.s32.totalorder %s237, %s238
      %p247 = scmp.eq.s32.totalorder %s38, 0
      %p248 = por %p246, %p247
      %p249 = scmp.ne.s32.totalorder %s237, %s238
      %p250 = scmp.eq.s32.totalorder %s39, 1
      %p251 = por %p249, %p250
      %p253 = scmp.ne.s32.totalorder %s238, %s252
      %p254 = scmp.eq.s32.totalorder %s39, 0
      %p255 = por %p253, %p254
      %s257 = sadd.s32 %s256, 1
      %p260 = scmp.eq.s32.totalorder %s33, 1
      %p261 = scmp.ne.s32.totalorder %s256, %s258
      %p262 = scmp.eq.s32.totalorder %s33, 0
      %p263 = por %p261, %p262
      %p264 = scmp.ne.s32.totalorder %s256, %s258
      %p265 = scmp.eq.s32.totalorder %s38, 1
      %p266 = por %p264, %p265
      %p267 = scmp.ne.s32.totalorder %s258, %s259
      %p268 = scmp.eq.s32.totalorder %s38, 0
      %p269 = por %p267, %p268
      %p270 = scmp.ne.s32.totalorder %s258, %s259
      %p271 = scmp.eq.s32.totalorder %s39, 1
      %p272 = por %p270, %p271
      %p274 = scmp.ne.s32.totalorder %s259, %s273
      %p275 = scmp.eq.s32.totalorder %s39, 0
      %p276 = por %p274, %p275
      %s277 = ssub.s32 %s33, %s40
      %p278 = scmp.eq.s32.totalorder %s277, 0
      %s280 = sadd.s32 %s279, 1
      %s281 = scalar_select %p278, %s279, %s280
      %p284 = pneg %p278
      %p285 = scmp.eq.s32.totalorder %s33, 1
      %p286 = por %p284, %p285
      %p287 = scmp.ne.s32.totalorder %s279, %s282
      %p288 = scmp.eq.s32.totalorder %s33, 0
      %p289 = por %p287, %p288
      %p290 = scmp.ne.s32.totalorder %s279, %s282
      %p291 = scmp.eq.s32.totalorder %s38, 1
      %p292 = por %p290, %p291
      %p293 = scmp.ne.s32.totalorder %s282, %s283
      %p294 = scmp.eq.s32.totalorder %s38, 0
      %p295 = por %p293, %p294
      %p296 = scmp.ne.s32.totalorder %s282, %s283
      %p297 = scmp.eq.s32.totalorder %s39, 1
      %p298 = por %p296, %p297
      %p300 = scmp.ne.s32.totalorder %s283, %s299
      %p301 = scmp.eq.s32.totalorder %s39, 0
      %p302 = por %p300, %p301
      %p303 = scmp.le.s32.totalorder 1, %s33
      %p304 = scmp.lt.s32.totalorder %s33, 3
      %p305 = pnand %p303, %p304
      %p306 = pneg %p305
      // Predicated region
      $region9: #{tpu_custom_call.1} parent=5 // pred_check
        _
      $region10: #{tpu_custom_call.1} parent=5 // pred_check_branch
        %308 = sbr.rel (%p305) target = $region12
      $region11: #{tpu_custom_call.1} parent=5 // pred_region
        %s309 = ssub.s32 %s33, 1
        // Predicated region
        $region13: #{tpu_custom_call.1} parent=11 // pred_check
          %p310 = pneg %p80
        $region14: #{tpu_custom_call.1} parent=11 // pred_check_branch
          %312 = sbr.rel (%p310) target = $region16
        $region15: #{tpu_custom_call.1} parent=11 // pred_region
          %s314 = ssub.s32 256, 256
          %315 = vsyncadd [#allocation8], %s314
          %s316 = sshll.u32 [#allocation7], 4
          %s317 = int_to_ptr.vmem [resolvable:$true] %s316
          %322 = dma.hbm_to_vmem [thread:$0]  %s2, 256, %s317, [#allocation8], 64, 64, 4
        $region16: #{tpu_custom_call.1} parent=11 // pred_fallthru
          _
        // Predicated region
        $region17: #{tpu_custom_call.1} parent=11 // pred_check
          %p323 = pneg %p101
        $region18: #{tpu_custom_call.1} parent=11 // pred_check_branch
          %325 = sbr.rel (%p323) target = $region20
        $region19: #{tpu_custom_call.1} parent=11 // pred_region
          %s327 = ssub.s32 256, 256
          %328 = vsyncadd [#allocation8], %s327
          %s329 = sshll.u32 [#allocation9], 4
          %s330 = int_to_ptr.vmem [resolvable:$true] %s329
          %335 = dma.hbm_to_vmem [thread:$0]  %s3, 256, %s330, [#allocation8], 64, 64, 4
        $region20: #{tpu_custom_call.1} parent=11 // pred_fallthru
          _
        // Predicated region
        $region21: #{tpu_custom_call.1} parent=11 // pred_check
          %p336 = pneg %p122
        $region22: #{tpu_custom_call.1} parent=11 // pred_check_branch
          %338 = sbr.rel (%p336) target = $region24
        $region23: #{tpu_custom_call.1} parent=11 // pred_region
          %s340 = ssub.s32 256, 256
          %341 = vsyncadd [#allocation11], %s340
          %s342 = sshll.u32 [#allocation10], 4
          %s343 = int_to_ptr.vmem [resolvable:$true] %s342
          %348 = dma.hbm_to_vmem [thread:$0]  %s4, 256, %s343, [#allocation11], 64, 64, 4
        $region24: #{tpu_custom_call.1} parent=11 // pred_fallthru
          _
        // Predicated region
        $region25: #{tpu_custom_call.1} parent=11 // pred_check
          %p349 = pneg %p143
        $region26: #{tpu_custom_call.1} parent=11 // pred_check_branch
          %351 = sbr.rel (%p349) target = $region28
        $region27: #{tpu_custom_call.1} parent=11 // pred_region
          %s353 = ssub.s32 512, 512
          %354 = vsyncadd [#allocation11], %s353
          %s355 = sshll.u32 [#allocation12], 4
          %s356 = int_to_ptr.vmem [resolvable:$true] %s355
          %361 = dma.hbm_to_vmem [thread:$0]  %s5, 512, %s356, [#allocation11], 64, 64, 4
        $region28: #{tpu_custom_call.1} parent=11 // pred_fallthru
          _
        // Predicated region
        $region29: #{tpu_custom_call.1} parent=11 // pred_check
          %p362 = pneg %p164
        $region30: #{tpu_custom_call.1} parent=11 // pred_check_branch
          %364 = sbr.rel (%p362) target = $region32
        $region31: #{tpu_custom_call.1} parent=11 // pred_region
          %s366 = ssub.s32 16, 16
          %367 = vsyncadd [#allocation14], %s366
          %s369 = sshll.u32 [#allocation13], 4
          %s370 = int_to_ptr.vmem [resolvable:$true] %s369
          %372 = dma.hbm_to_vmem [thread:$0]  %s6, 16, %s370, [#allocation14]
        $region32: #{tpu_custom_call.1} parent=11 // pred_fallthru
          _
        // Predicated region
        $region33: #{tpu_custom_call.1} parent=11 // pred_check
          %p373 = pneg %p185
        $region34: #{tpu_custom_call.1} parent=11 // pred_check_branch
          %375 = sbr.rel (%p373) target = $region36
        $region35: #{tpu_custom_call.1} parent=11 // pred_region
          %s377 = ssub.s32 16, 16
          %378 = vsyncadd [#allocation14], %s377
          %s380 = sshll.u32 [#allocation15], 4
          %s381 = int_to_ptr.vmem [resolvable:$true] %s380
          %383 = dma.hbm_to_vmem [thread:$0]  %s7, 16, %s381, [#allocation14]
        $region36: #{tpu_custom_call.1} parent=11 // pred_fallthru
          _
        // Predicated region
        $region37: #{tpu_custom_call.1} parent=11 // pred_check
          %p384 = pneg %p206
        $region38: #{tpu_custom_call.1} parent=11 // pred_check_branch
          %386 = sbr.rel (%p384) target = $region40
        $region39: #{tpu_custom_call.1} parent=11 // pred_region
          %s388 = ssub.s32 16, 16
          %389 = vsyncadd [#allocation17], %s388
          %s391 = sshll.u32 [#allocation16], 4
          %s392 = int_to_ptr.vmem [resolvable:$true] %s391
          %394 = dma.hbm_to_vmem [thread:$0]  %s8, 16, %s392, [#allocation17]
        $region40: #{tpu_custom_call.1} parent=11 // pred_fallthru
          _
        // Predicated region
        $region41: #{tpu_custom_call.1} parent=11 // pred_check
          %p395 = pneg %p227
        $region42: #{tpu_custom_call.1} parent=11 // pred_check_branch
          %397 = sbr.rel (%p395) target = $region44
        $region43: #{tpu_custom_call.1} parent=11 // pred_region
          %s399 = ssub.s32 16, 16
          %400 = vsyncadd [#allocation17], %s399
          %s402 = sshll.u32 [#allocation18], 4
          %s403 = int_to_ptr.vmem [resolvable:$true] %s402
          %405 = dma.hbm_to_vmem [thread:$0]  %s9, 16, %s403, [#allocation17]
        $region44: #{tpu_custom_call.1} parent=11 // pred_fallthru
          _
        // Predicated region
        $region45: #{tpu_custom_call.1} parent=11 // pred_check
          %p406 = pneg %p248
        $region46: #{tpu_custom_call.1} parent=11 // pred_check_branch
          %408 = sbr.rel (%p406) target = $region48
        $region47: #{tpu_custom_call.1} parent=11 // pred_region
          %s410 = ssub.s32 16, 16
          %411 = vsyncadd [#allocation20], %s410
          %s413 = sshll.u32 [#allocation19], 4
          %s414 = int_to_ptr.vmem [resolvable:$true] %s413
          %416 = dma.hbm_to_vmem [thread:$0]  %s10, 16, %s414, [#allocation20]
        $region48: #{tpu_custom_call.1} parent=11 // pred_fallthru
          _
        // Predicated region
        $region49: #{tpu_custom_call.1} parent=11 // pred_check
          %p417 = pneg %p269
        $region50: #{tpu_custom_call.1} parent=11 // pred_check_branch
          %419 = sbr.rel (%p417) target = $region52
        $region51: #{tpu_custom_call.1} parent=11 // pred_region
          %s421 = ssub.s32 16, 16
          %422 = vsyncadd [#allocation20], %s421
          %s424 = sshll.u32 [#allocation21], 4
          %s425 = int_to_ptr.vmem [resolvable:$true] %s424
          %427 = dma.hbm_to_vmem [thread:$0]  %s11, 16, %s425, [#allocation20]
        $region52: #{tpu_custom_call.1} parent=11 // pred_fallthru
          _
      $region12: #{tpu_custom_call.1} parent=5 // pred_fallthru
        _
      %p428 = scmp.lt.s32.totalorder %s33, 2
      // Predicated region
      $region53: #{tpu_custom_call.1} parent=5 // pred_check
        %p429 = pneg %p428
      $region54: #{tpu_custom_call.1} parent=5 // pred_check_branch
        %431 = sbr.rel (%p429) target = $region56
      $region55: #{tpu_custom_call.1} parent=5 // pred_region
        // Predicated region
        $region57: #{tpu_custom_call.1} parent=55 // pred_check
          %p432 = pneg %p53
        $region58: #{tpu_custom_call.1} parent=55 // pred_check_branch
          %434 = sbr.rel (%p432) target = $region60
        $region59: #{tpu_custom_call.1} parent=55 // pred_region
          %s435 = sand.u32 %s43, 1
          %s436 = scalar_lea.sflag [#allocation5], %s435
          %s437 = sand.u32 %s43, 1
          %s438 = smul.addr %s437, 8
          %s439 = scalar_lea.vmem [#allocation4], %s438
          %s441 = ssub.s32 128, 128
          %442 = vsyncadd %s436, %s441
          %s443 = smul.addr %s33, 128
          %s444 = scalar_lea.hbm %s1, %s443
          %s446 = sshll.u32 %s439, 4
          %s447 = int_to_ptr.vmem [resolvable:$true] %s446
          %449 = dma.hbm_to_vmem [thread:$0]  %s444, 128, %s447, %s436
        $region60: #{tpu_custom_call.1} parent=55 // pred_fallthru
          _
      $region56: #{tpu_custom_call.1} parent=5 // pred_fallthru
        _
      %p450 = scmp.le.s32.totalorder 1, %s33
      %p451 = scmp.lt.s32.totalorder %s33, 3
      %p452 = pnand %p450, %p451
      %p453 = pneg %p452
      // Predicated region
      $region61: #{tpu_custom_call.1} parent=5 // pred_check
        _
      $region62: #{tpu_custom_call.1} parent=5 // pred_check_branch
        %455 = sbr.rel (%p452) target = $region64
      $region63: #{tpu_custom_call.1} parent=5 // pred_region
        %s456 = ssub.s32 %s33, 1
        %s457 = sand.u32 %s46, 1
        %s458 = scalar_lea.sflag [#allocation5], %s457
        %s459 = sand.u32 %s46, 1
        %s460 = smul.addr %s459, 8
        %s461 = scalar_lea.vmem [#allocation4], %s460
        // Predicated region
        $region65: #{tpu_custom_call.1} parent=63 // pred_check
          %p462 = pneg %p59
        $region66: #{tpu_custom_call.1} parent=63 // pred_check_branch
          %464 = sbr.rel (%p462) target = $region68
        $region67: #{tpu_custom_call.1} parent=63 // pred_region
          %465 = dma.done %s458, 128
        $region68: #{tpu_custom_call.1} parent=63 // pred_fallthru
          _
        // Predicated region
        $region69: #{tpu_custom_call.1} parent=63 // pred_check
          %p466 = pneg %p80
        $region70: #{tpu_custom_call.1} parent=63 // pred_check_branch
          %468 = sbr.rel (%p466) target = $region72
        $region71: #{tpu_custom_call.1} parent=63 // pred_region
          %469 = dma.done [#allocation8], 256
        $region72: #{tpu_custom_call.1} parent=63 // pred_fallthru
          _
        // Predicated region
        $region73: #{tpu_custom_call.1} parent=63 // pred_check
          %p470 = pneg %p101
        $region74: #{tpu_custom_call.1} parent=63 // pred_check_branch
          %472 = sbr.rel (%p470) target = $region76
        $region75: #{tpu_custom_call.1} parent=63 // pred_region
          %473 = dma.done [#allocation8], 256
        $region76: #{tpu_custom_call.1} parent=63 // pred_fallthru
          _
        // Predicated region
        $region77: #{tpu_custom_call.1} parent=63 // pred_check
          %p474 = pneg %p122
        $region78: #{tpu_custom_call.1} parent=63 // pred_check_branch
          %476 = sbr.rel (%p474) target = $region80
        $region79: #{tpu_custom_call.1} parent=63 // pred_region
          %477 = dma.done [#allocation11], 256
        $region80: #{tpu_custom_call.1} parent=63 // pred_fallthru
          _
        // Predicated region
        $region81: #{tpu_custom_call.1} parent=63 // pred_check
          %p478 = pneg %p143
        $region82: #{tpu_custom_call.1} parent=63 // pred_check_branch
          %480 = sbr.rel (%p478) target = $region84
        $region83: #{tpu_custom_call.1} parent=63 // pred_region
          %481 = dma.done [#allocation11], 512
        $region84: #{tpu_custom_call.1} parent=63 // pred_fallthru
          _
        // Predicated region
        $region85: #{tpu_custom_call.1} parent=63 // pred_check
          %p482 = pneg %p164
        $region86: #{tpu_custom_call.1} parent=63 // pred_check_branch
          %484 = sbr.rel (%p482) target = $region88
        $region87: #{tpu_custom_call.1} parent=63 // pred_region
          %485 = dma.done [#allocation14], 16
        $region88: #{tpu_custom_call.1} parent=63 // pred_fallthru
          _
        // Predicated region
        $region89: #{tpu_custom_call.1} parent=63 // pred_check
          %p486 = pneg %p185
        $region90: #{tpu_custom_call.1} parent=63 // pred_check_branch
          %488 = sbr.rel (%p486) target = $region92
        $region91: #{tpu_custom_call.1} parent=63 // pred_region
          %489 = dma.done [#allocation14], 16
        $region92: #{tpu_custom_call.1} parent=63 // pred_fallthru
          _
        // Predicated region
        $region93: #{tpu_custom_call.1} parent=63 // pred_check
          %p490 = pneg %p206
        $region94: #{tpu_custom_call.1} parent=63 // pred_check_branch
          %492 = sbr.rel (%p490) target = $region96
        $region95: #{tpu_custom_call.1} parent=63 // pred_region
          %493 = dma.done [#allocation17], 16
        $region96: #{tpu_custom_call.1} parent=63 // pred_fallthru
          _
        // Predicated region
        $region97: #{tpu_custom_call.1} parent=63 // pred_check
          %p494 = pneg %p227
        $region98: #{tpu_custom_call.1} parent=63 // pred_check_branch
          %496 = sbr.rel (%p494) target = $region100
        $region99: #{tpu_custom_call.1} parent=63 // pred_region
          %497 = dma.done [#allocation17], 16
        $region100: #{tpu_custom_call.1} parent=63 // pred_fallthru
          _
        // Predicated region
        $region101: #{tpu_custom_call.1} parent=63 // pred_check
          %p498 = pneg %p248
        $region102: #{tpu_custom_call.1} parent=63 // pred_check_branch
          %500 = sbr.rel (%p498) target = $region104
        $region103: #{tpu_custom_call.1} parent=63 // pred_region
          %501 = dma.done [#allocation20], 16
        $region104: #{tpu_custom_call.1} parent=63 // pred_fallthru
          _
        // Predicated region
        $region105: #{tpu_custom_call.1} parent=63 // pred_check
          %p502 = pneg %p269
        $region106: #{tpu_custom_call.1} parent=63 // pred_check_branch
          %504 = sbr.rel (%p502) target = $region108
        $region107: #{tpu_custom_call.1} parent=63 // pred_region
          %505 = dma.done [#allocation20], 16
        $region108: #{tpu_custom_call.1} parent=63 // pred_fallthru
          _
        %s506 = sand.u32 %s46, 1
        %s507 = scalar_lea.sflag [#allocation5], %s506
        %s508 = sand.u32 %s46, 1
        %s509 = smul.addr %s508, 8
        %s510 = scalar_lea.vmem [#allocation4], %s509
        %p511 = pneg %p59
        %p512 = pneg %p56
        %p513 = pneg %p80
        %p514 = pneg %p77
        %p515 = pneg %p101
        %p516 = pneg %p98
        %p517 = pneg %p122
        %p518 = pneg %p119
        %p519 = pneg %p143
        %p520 = pneg %p140
        %p521 = pneg %p164
        %p522 = pneg %p161
        %p523 = pneg %p185
        %p524 = pneg %p182
        %p525 = pneg %p206
        %p526 = pneg %p203
        %p527 = pneg %p227
        %p528 = pneg %p224
        %p529 = pneg %p248
        %p530 = pneg %p245
        %p531 = pneg %p269
        %p532 = pneg %p266
        %p533 = pneg %p295
        %p534 = pneg %p292
        %s535 = sand.u32 %s282, 1
        %s536 = scalar_lea.sflag [#allocation6], %s535
        %s537 = sand.u32 %s282, 1
        %s538 = smul.addr %s537, 8
        %s539 = scalar_lea.vmem [#allocation22], %s538
        %v541 = vld [vmem:[%s461] sm:$0xff]
        %v542 = vpack.c.bf16 %v541, %v541
        %v543 = vld [vmem:[#allocation7] sm:$0xf]
        %v544 = vld [vmem:[#allocation7 + $0x4] sm:$0xf]
        %v545 = vld [vmem:[#allocation7 + $0x8] sm:$0xf]
        %v546 = vld [vmem:[#allocation7 + $0xc] sm:$0xf]
        %v551 = vunpack.c.l.b16 %v543
        %v552 = vunpack.c.l.b16 %v544
        %v553 = vunpack.c.l.b16 %v545
        %v554 = vunpack.c.l.b16 %v546
        %v555 = vpack.c.b16 %v552, %v551
        %v556 = vpack.c.b16 %v554, %v553
        %vm559 = vcmask 261120
        %v561 = vsel %vm559, %v542, 0
        %563 = vmatprep.subr.bf16.mxu0 0
        %564 = vmatpush1.bf16.msra.mxu0 %v555
        %565 = vmatprep.subr.bf16.mxu0 0
        %566 = vmatpush1.bf16.msra.mxu0 %v556
        %567 = vmatprep.subr.bf16.mxu0 0
        %568 = vmatpush1.bf16.msra.mxu0 0
        %569 = vmatprep.subr.bf16.mxu0 0
        %570 = vmatpush1.bf16.msra.mxu0 0
        %571 = vmatprep.subr.bf16.mxu0 0
        %572 = vmatpush1.bf16.msra.mxu0 0
        %573 = vmatprep.subr.bf16.mxu0 0
        %574 = vmatpush1.bf16.msra.mxu0 0
        %575 = vmatprep.subr.bf16.mxu0 0
        %576 = vmatpush1.bf16.msra.mxu0 0
        %577 = vmatprep.subr.bf16.mxu0 0
        %578 = vmatpush1.bf16.msra.mxu0 0
        %579 = vmatprep.subr.bf16.mxu0 0
        %580 = vmatpush1.bf16.msra.mxu0 0
        %581 = vmatprep.subr.bf16.mxu0 0
        %582 = vmatpush1.bf16.msra.mxu0 0
        %583 = vmatprep.subr.bf16.mxu0 0
        %584 = vmatpush1.bf16.msra.mxu0 0
        %585 = vmatprep.subr.bf16.mxu0 0
        %586 = vmatpush1.bf16.msra.mxu0 0
        %587 = vmatprep.subr.bf16.mxu0 0
        %588 = vmatpush1.bf16.msra.mxu0 0
        %589 = vmatprep.subr.bf16.mxu0 0
        %590 = vmatpush1.bf16.msra.mxu0 0
        %591 = vmatprep.subr.bf16.mxu0 0
        %592 = vmatpush1.bf16.msra.mxu0 0
        %593 = vmatprep.subr.bf16.mxu0 0
        %594 = vmatpush1.bf16.msra.mxu0 0
        %595 = vmatprep.mubr.bf16.mxu0 0
        %596 = vmatmul.mubr.bf16.gmra.mrb[0].mxu0 %v561
        %v597 = vpop.f32.mrb[0].mxu0
        %v598 = vadd.f32 0.0, %v597
        %v599 = vpop.f32.mrb[0].mxu0
        %v600 = vpop.f32.mrb[0].mxu0
        %v601 = vpop.f32.mrb[0].mxu0
        %602 = vdwg.mxu0
        %v603 = vpack.c.bf16 %v598, %v598
        %s604 = sld [smem:[#allocation3 + %s38]]
        %v605 = vlaneseq
        %v606 = vand.u32 %v605, 127
        %v607 = vstv %s604
        %vm608 = vcmp.lt.s32.totalorder %v606, %v607
        %v609 = vsel %vm608, 0.0, -1000000.0
        %611 = vrot.lane.b32.xlu0 %v603, 96
        %v612 = vpop.permute.xlu0 %611
        %vm613 = vcmask 64512
        %v615 = vsel %vm613, %v603, 0
        %v618 = vsel %vm613, %v612, 0
        %620 = vmatprep.subr.bf16.mxu0 0
        %621 = vmatpush1.bf16.xpose.msra.mxu0 %v618
        %622 = vmatprep.subr.bf16.mxu0 0
        %623 = vmatpush1.bf16.xpose.msra.mxu0 0
        %624 = vmatprep.subr.bf16.mxu0 0
        %625 = vmatpush1.bf16.xpose.msra.mxu0 0
        %626 = vmatprep.subr.bf16.mxu0 0
        %627 = vmatpush1.bf16.xpose.msra.mxu0 0
        %628 = vmatprep.subr.bf16.mxu0 0
        %629 = vmatpush1.bf16.xpose.msra.mxu0 0
        %630 = vmatprep.subr.bf16.mxu0 0
        %631 = vmatpush1.bf16.xpose.msra.mxu0 0
        %632 = vmatprep.subr.bf16.mxu0 0
        %633 = vmatpush1.bf16.xpose.msra.mxu0 0
        %634 = vmatprep.subr.bf16.mxu0 0
        %635 = vmatpush1.bf16.xpose.msra.mxu0 0
        %636 = vmatprep.subr.bf16.mxu0 0
        %637 = vmatpush1.bf16.xpose.msra.mxu0 0
        %638 = vmatprep.subr.bf16.mxu0 0
        %639 = vmatpush1.bf16.xpose.msra.mxu0 0
        %640 = vmatprep.subr.bf16.mxu0 0
        %641 = vmatpush1.bf16.xpose.msra.mxu0 0
        %642 = vmatprep.subr.bf16.mxu0 0
        %643 = vmatpush1.bf16.xpose.msra.mxu0 0
        %644 = vmatprep.subr.bf16.mxu0 0
        %645 = vmatpush1.bf16.xpose.msra.mxu0 0
        %646 = vmatprep.subr.bf16.mxu0 0
        %647 = vmatpush1.bf16.xpose.msra.mxu0 0
        %648 = vmatprep.subr.bf16.mxu0 0
        %649 = vmatpush1.bf16.xpose.msra.mxu0 0
        %650 = vmatprep.subr.bf16.mxu0 0
        %651 = vmatpush1.bf16.xpose.msra.mxu0 0
        %652 = vmatprep.mubr.bf16.mxu0 0
        %653 = vmatmul.mubr.bf16.gmra.mrb[0].mxu0 %v615
        %v654 = vpop.f32.mrb[0].mxu0
        %v655 = vadd.f32 %v609, %v654
        %v656 = vpop.f32.mrb[0].mxu0
        %v657 = vpop.f32.mrb[0].mxu0
        %v658 = vpop.f32.mrb[0].mxu0
        %659 = vdwg.mxu0
        %v660 = vsel %vm613, %v655, -inf
        %661 = vmax.xlane.f32.xlu0 %v660
        %v662 = vpop.xlane.xlu0 %661
        %v663 = vsub.f32 %v655, %v662
        %v664 = vmul.f32 %v663, 1.442695
        %v665 = vpow.pop %v664
        %v666 = vsel %vm613, %v665, 0.0
        %667 = vadd.xlane.f32.xlu0 %v666
        %v668 = vpop.xlane.xlu0 %667
        %v669 = vrcp.pop %v668
        %v670 = vmul.f32 %v665, %v669
        %v671 = vpack.c.bf16 %v670, %v670
        %672 = vrot.lane.b32.xlu0 %v603, 64
        %v673 = vpop.permute.xlu0 %672
        %v675 = vsel %vm613, %v671, 0
        %vm677 = vcmask 1043456
        %v679 = vsel %vm677, %v673, 0
        %681 = vmatprep.subr.bf16.mxu0 0
        %682 = vmatpush1.bf16.msra.mxu0 %v679
        %683 = vmatprep.subr.bf16.mxu0 0
        %684 = vmatpush1.bf16.msra.mxu0 0
        %685 = vmatprep.subr.bf16.mxu0 0
        %686 = vmatpush1.bf16.msra.mxu0 0
        %687 = vmatprep.subr.bf16.mxu0 0
        %688 = vmatpush1.bf16.msra.mxu0 0
        %689 = vmatprep.subr.bf16.mxu0 0
        %690 = vmatpush1.bf16.msra.mxu0 0
        %691 = vmatprep.subr.bf16.mxu0 0
        %692 = vmatpush1.bf16.msra.mxu0 0
        %693 = vmatprep.subr.bf16.mxu0 0
        %694 = vmatpush1.bf16.msra.mxu0 0
        %695 = vmatprep.subr.bf16.mxu0 0
        %696 = vmatpush1.bf16.msra.mxu0 0
        %697 = vmatprep.subr.bf16.mxu0 0
        %698 = vmatpush1.bf16.msra.mxu0 0
        %699 = vmatprep.subr.bf16.mxu0 0
        %700 = vmatpush1.bf16.msra.mxu0 0
        %701 = vmatprep.subr.bf16.mxu0 0
        %702 = vmatpush1.bf16.msra.mxu0 0
        %703 = vmatprep.subr.bf16.mxu0 0
        %704 = vmatpush1.bf16.msra.mxu0 0
        %705 = vmatprep.subr.bf16.mxu0 0
        %706 = vmatpush1.bf16.msra.mxu0 0
        %707 = vmatprep.subr.bf16.mxu0 0
        %708 = vmatpush1.bf16.msra.mxu0 0
        %709 = vmatprep.subr.bf16.mxu0 0
        %710 = vmatpush1.bf16.msra.mxu0 0
        %711 = vmatprep.subr.bf16.mxu0 0
        %712 = vmatpush1.bf16.msra.mxu0 0
        %713 = vmatprep.mubr.bf16.mxu0 0
        %714 = vmatmul.mubr.bf16.gmra.mrb[0].mxu0 %v675
        %v715 = vpop.f32.mrb[0].mxu0
        %v716 = vadd.f32 0.0, %v715
        %v717 = vpop.f32.mrb[0].mxu0
        %v718 = vpop.f32.mrb[0].mxu0
        %v719 = vpop.f32.mrb[0].mxu0
        %720 = vdwg.mxu0
        %v721 = vpack.c.bf16 %v716, %v716
        %v722 = vld [vmem:[#allocation9] sm:$0xf]
        %723 = vrot.lane.b32.xlu0 %v603, 120
        %v724 = vpop.permute.xlu0 %723
        %725 = vrot.lane.b32.xlu0 %v603, 88
        %v726 = vpop.permute.xlu0 %725
        %v728 = vsel %vm613, %v724, 0
        %v731 = vsel %vm613, %v726, 0
        %733 = vmatprep.subr.bf16.mxu0 0
        %734 = vmatpush1.bf16.xpose.msra.mxu0 %v731
        %735 = vmatprep.subr.bf16.mxu0 0
        %736 = vmatpush1.bf16.xpose.msra.mxu0 0
        %737 = vmatprep.subr.bf16.mxu0 0
        %738 = vmatpush1.bf16.xpose.msra.mxu0 0
        %739 = vmatprep.subr.bf16.mxu0 0
        %740 = vmatpush1.bf16.xpose.msra.mxu0 0
        %741 = vmatprep.subr.bf16.mxu0 0
        %742 = vmatpush1.bf16.xpose.msra.mxu0 0
        %743 = vmatprep.subr.bf16.mxu0 0
        %744 = vmatpush1.bf16.xpose.msra.mxu0 0
        %745 = vmatprep.subr.bf16.mxu0 0
        %746 = vmatpush1.bf16.xpose.msra.mxu0 0
        %747 = vmatprep.subr.bf16.mxu0 0
        %748 = vmatpush1.bf16.xpose.msra.mxu0 0
        %749 = vmatprep.subr.bf16.mxu0 0
        %750 = vmatpush1.bf16.xpose.msra.mxu0 0
        %751 = vmatprep.subr.bf16.mxu0 0
        %752 = vmatpush1.bf16.xpose.msra.mxu0 0
        %753 = vmatprep.subr.bf16.mxu0 0
        %754 = vmatpush1.bf16.xpose.msra.mxu0 0
        %755 = vmatprep.subr.bf16.mxu0 0
        %756 = vmatpush1.bf16.xpose.msra.mxu0 0
        %757 = vmatprep.subr.bf16.mxu0 0
        %758 = vmatpush1.bf16.xpose.msra.mxu0 0
        %759 = vmatprep.subr.bf16.mxu0 0
        %760 = vmatpush1.bf16.xpose.msra.mxu0 0
        %761 = vmatprep.subr.bf16.mxu0 0
        %762 = vmatpush1.bf16.xpose.msra.mxu0 0
        %763 = vmatprep.subr.bf16.mxu0 0
        %764 = vmatpush1.bf16.xpose.msra.mxu0 0
        %765 = vmatprep.mubr.bf16.mxu0 0
        %766 = vmatmul.mubr.bf16.gmra.mrb[0].mxu0 %v728
        %v767 = vpop.f32.mrb[0].mxu0
        %v768 = vadd.f32 %v609, %v767
        %v769 = vpop.f32.mrb[0].mxu0
        %v770 = vpop.f32.mrb[0].mxu0
        %v771 = vpop.f32.mrb[0].mxu0
        %772 = vdwg.mxu0
        %v773 = vsel %vm613, %v768, -inf
        %774 = vmax.xlane.f32.xlu0 %v773
        %v775 = vpop.xlane.xlu0 %774
        %v776 = vsub.f32 %v768, %v775
        %v777 = vmul.f32 %v776, 1.442695
        %v778 = vpow.pop %v777
        %v779 = vsel %vm613, %v778, 0.0
        %780 = vadd.xlane.f32.xlu0 %v779
        %v781 = vpop.xlane.xlu0 %780
        %v782 = vrcp.pop %v781
        %v783 = vmul.f32 %v778, %v782
        %v784 = vpack.c.bf16 %v783, %v783
        %785 = vrot.lane.b32.xlu0 %v603, 56
        %v786 = vpop.permute.xlu0 %785
        %v788 = vsel %vm613, %v784, 0
        %v791 = vsel %vm677, %v786, 0
        %793 = vmatprep.subr.bf16.mxu0 0
        %794 = vmatpush1.bf16.msra.mxu0 %v791
        %795 = vmatprep.subr.bf16.mxu0 0
        %796 = vmatpush1.bf16.msra.mxu0 0
        %797 = vmatprep.subr.bf16.mxu0 0
        %798 = vmatpush1.bf16.msra.mxu0 0
        %799 = vmatprep.subr.bf16.mxu0 0
        %800 = vmatpush1.bf16.msra.mxu0 0
        %801 = vmatprep.subr.bf16.mxu0 0
        %802 = vmatpush1.bf16.msra.mxu0 0
        %803 = vmatprep.subr.bf16.mxu0 0
        %804 = vmatpush1.bf16.msra.mxu0 0
        %805 = vmatprep.subr.bf16.mxu0 0
        %806 = vmatpush1.bf16.msra.mxu0 0
        %807 = vmatprep.subr.bf16.mxu0 0
        %808 = vmatpush1.bf16.msra.mxu0 0
        %809 = vmatprep.subr.bf16.mxu0 0
        %810 = vmatpush1.bf16.msra.mxu0 0
        %811 = vmatprep.subr.bf16.mxu0 0
        %812 = vmatpush1.bf16.msra.mxu0 0
        %813 = vmatprep.subr.bf16.mxu0 0
        %814 = vmatpush1.bf16.msra.mxu0 0
        %815 = vmatprep.subr.bf16.mxu0 0
        %816 = vmatpush1.bf16.msra.mxu0 0
        %817 = vmatprep.subr.bf16.mxu0 0
        %818 = vmatpush1.bf16.msra.mxu0 0
        %819 = vmatprep.subr.bf16.mxu0 0
        %820 = vmatpush1.bf16.msra.mxu0 0
        %821 = vmatprep.subr.bf16.mxu0 0
        %822 = vmatpush1.bf16.msra.mxu0 0
        %823 = vmatprep.subr.bf16.mxu0 0
        %824 = vmatpush1.bf16.msra.mxu0 0
        %825 = vmatprep.mubr.bf16.mxu0 0
        %826 = vmatmul.mubr.bf16.gmra.mrb[0].mxu0 %v788
        %v827 = vpop.f32.mrb[0].mxu0
        %v828 = vadd.f32 0.0, %v827
        %v829 = vpop.f32.mrb[0].mxu0
        %v830 = vpop.f32.mrb[0].mxu0
        %v831 = vpop.f32.mrb[0].mxu0
        %832 = vdwg.mxu0
        %v833 = vpack.c.bf16 %v828, %v828
        %v834 = vld [vmem:[#allocation9 + $0x4] sm:$0xf]
        %v836 = vsel %vm613, %v833, 0
        %v839 = vsel %vm677, %v834, 0
        %841 = vmatprep.subr.bf16.mxu0 0
        %842 = vmatpush1.bf16.msra.mxu0 %v839
        %843 = vmatprep.subr.bf16.mxu0 0
        %844 = vmatpush1.bf16.msra.mxu0 0
        %845 = vmatprep.subr.bf16.mxu0 0
        %846 = vmatpush1.bf16.msra.mxu0 0
        %847 = vmatprep.subr.bf16.mxu0 0
        %848 = vmatpush1.bf16.msra.mxu0 0
        %849 = vmatprep.subr.bf16.mxu0 0
        %850 = vmatpush1.bf16.msra.mxu0 0
        %851 = vmatprep.subr.bf16.mxu0 0
        %852 = vmatpush1.bf16.msra.mxu0 0
        %853 = vmatprep.subr.bf16.mxu0 0
        %854 = vmatpush1.bf16.msra.mxu0 0
        %855 = vmatprep.subr.bf16.mxu0 0
        %856 = vmatpush1.bf16.msra.mxu0 0
        %857 = vmatprep.subr.bf16.mxu0 0
        %858 = vmatpush1.bf16.msra.mxu0 0
        %859 = vmatprep.subr.bf16.mxu0 0
        %860 = vmatpush1.bf16.msra.mxu0 0
        %861 = vmatprep.subr.bf16.mxu0 0
        %862 = vmatpush1.bf16.msra.mxu0 0
        %863 = vmatprep.subr.bf16.mxu0 0
        %864 = vmatpush1.bf16.msra.mxu0 0
        %865 = vmatprep.subr.bf16.mxu0 0
        %866 = vmatpush1.bf16.msra.mxu0 0
        %867 = vmatprep.subr.bf16.mxu0 0
        %868 = vmatpush1.bf16.msra.mxu0 0
        %869 = vmatprep.subr.bf16.mxu0 0
        %870 = vmatpush1.bf16.msra.mxu0 0
        %871 = vmatprep.subr.bf16.mxu0 0
        %872 = vmatpush1.bf16.msra.mxu0 0
        %873 = vmatprep.mubr.bf16.mxu0 0
        %874 = vmatmul.mubr.bf16.gmra.mrb[0].mxu0 %v836
        %v875 = vpop.f32.mrb[0].mxu0
        %v876 = vadd.f32 0.0, %v875
        %v877 = vpop.f32.mrb[0].mxu0
        %v878 = vpop.f32.mrb[0].mxu0
        %v879 = vpop.f32.mrb[0].mxu0
        %880 = vdwg.mxu0
        %v882 = vsel %vm613, %v721, 0
        %v885 = vsel %vm677, %v722, 0
        %887 = vmatprep.subr.bf16.mxu0 0
        %888 = vmatpush1.bf16.msra.mxu0 %v885
        %889 = vmatprep.subr.bf16.mxu0 0
        %890 = vmatpush1.bf16.msra.mxu0 0
        %891 = vmatprep.subr.bf16.mxu0 0
        %892 = vmatpush1.bf16.msra.mxu0 0
        %893 = vmatprep.subr.bf16.mxu0 0
        %894 = vmatpush1.bf16.msra.mxu0 0
        %895 = vmatprep.subr.bf16.mxu0 0
        %896 = vmatpush1.bf16.msra.mxu0 0
        %897 = vmatprep.subr.bf16.mxu0 0
        %898 = vmatpush1.bf16.msra.mxu0 0
        %899 = vmatprep.subr.bf16.mxu0 0
        %900 = vmatpush1.bf16.msra.mxu0 0
        %901 = vmatprep.subr.bf16.mxu0 0
        %902 = vmatpush1.bf16.msra.mxu0 0
        %903 = vmatprep.subr.bf16.mxu0 0
        %904 = vmatpush1.bf16.msra.mxu0 0
        %905 = vmatprep.subr.bf16.mxu0 0
        %906 = vmatpush1.bf16.msra.mxu0 0
        %907 = vmatprep.subr.bf16.mxu0 0
        %908 = vmatpush1.bf16.msra.mxu0 0
        %909 = vmatprep.subr.bf16.mxu0 0
        %910 = vmatpush1.bf16.msra.mxu0 0
        %911 = vmatprep.subr.bf16.mxu0 0
        %912 = vmatpush1.bf16.msra.mxu0 0
        %913 = vmatprep.subr.bf16.mxu0 0
        %914 = vmatpush1.bf16.msra.mxu0 0
        %915 = vmatprep.subr.bf16.mxu0 0
        %916 = vmatpush1.bf16.msra.mxu0 0
        %917 = vmatprep.subr.bf16.mxu0 0
        %918 = vmatpush1.bf16.msra.mxu0 0
        %919 = vmatprep.mubr.bf16.mxu0 0
        %920 = vmatmul.mubr.bf16.gmra.mrb[0].mxu0 %v882
        %v921 = vpop.f32.mrb[0].mxu0
        %v922 = vadd.f32 %v876, %v921
        %v923 = vpop.f32.mrb[0].mxu0
        %v924 = vpop.f32.mrb[0].mxu0
        %v925 = vpop.f32.mrb[0].mxu0
        %926 = vdwg.mxu0
        %927 = vrot.lane.b32.xlu0 %v603, 112
        %v928 = vpop.permute.xlu0 %927
        %929 = vrot.lane.b32.xlu0 %v603, 80
        %v930 = vpop.permute.xlu0 %929
        %v932 = vsel %vm613, %v928, 0
        %v935 = vsel %vm613, %v930, 0
        %937 = vmatprep.subr.bf16.mxu0 0
        %938 = vmatpush1.bf16.xpose.msra.mxu0 %v935
        %939 = vmatprep.subr.bf16.mxu0 0
        %940 = vmatpush1.bf16.xpose.msra.mxu0 0
        %941 = vmatprep.subr.bf16.mxu0 0
        %942 = vmatpush1.bf16.xpose.msra.mxu0 0
        %943 = vmatprep.subr.bf16.mxu0 0
        %944 = vmatpush1.bf16.xpose.msra.mxu0 0
        %945 = vmatprep.subr.bf16.mxu0 0
        %946 = vmatpush1.bf16.xpose.msra.mxu0 0
        %947 = vmatprep.subr.bf16.mxu0 0
        %948 = vmatpush1.bf16.xpose.msra.mxu0 0
        %949 = vmatprep.subr.bf16.mxu0 0
        %950 = vmatpush1.bf16.xpose.msra.mxu0 0
        %951 = vmatprep.subr.bf16.mxu0 0
        %952 = vmatpush1.bf16.xpose.msra.mxu0 0
        %953 = vmatprep.subr.bf16.mxu0 0
        %954 = vmatpush1.bf16.xpose.msra.mxu0 0
        %955 = vmatprep.subr.bf16.mxu0 0
        %956 = vmatpush1.bf16.xpose.msra.mxu0 0
        %957 = vmatprep.subr.bf16.mxu0 0
        %958 = vmatpush1.bf16.xpose.msra.mxu0 0
        %959 = vmatprep.subr.bf16.mxu0 0
        %960 = vmatpush1.bf16.xpose.msra.mxu0 0
        %961 = vmatprep.subr.bf16.mxu0 0
        %962 = vmatpush1.bf16.xpose.msra.mxu0 0
        %963 = vmatprep.subr.bf16.mxu0 0
        %964 = vmatpush1.bf16.xpose.msra.mxu0 0
        %965 = vmatprep.subr.bf16.mxu0 0
        %966 = vmatpush1.bf16.xpose.msra.mxu0 0
        %967 = vmatprep.subr.bf16.mxu0 0
        %968 = vmatpush1.bf16.xpose.msra.mxu0 0
        %969 = vmatprep.mubr.bf16.mxu0 0
        %970 = vmatmul.mubr.bf16.gmra.mrb[0].mxu0 %v932
        %v971 = vpop.f32.mrb[0].mxu0
        %v972 = vadd.f32 %v609, %v971
        %v973 = vpop.f32.mrb[0].mxu0
        %v974 = vpop.f32.mrb[0].mxu0
        %v975 = vpop.f32.mrb[0].mxu0
        %976 = vdwg.mxu0
        %v977 = vsel %vm613, %v972, -inf
        %978 = vmax.xlane.f32.xlu0 %v977
        %v979 = vpop.xlane.xlu0 %978
        %v980 = vsub.f32 %v972, %v979
        %v981 = vmul.f32 %v980, 1.442695
        %v982 = vpow.pop %v981
        %v983 = vsel %vm613, %v982, 0.0
        %984 = vadd.xlane.f32.xlu0 %v983
        %v985 = vpop.xlane.xlu0 %984
        %v986 = vrcp.pop %v985
        %v987 = vmul.f32 %v982, %v986
        %v988 = vpack.c.bf16 %v987, %v987
        %989 = vrot.lane.b32.xlu0 %v603, 48
        %v990 = vpop.permute.xlu0 %989
        %v992 = vsel %vm613, %v988, 0
        %v995 = vsel %vm677, %v990, 0
        %997 = vmatprep.subr.bf16.mxu0 0
        %998 = vmatpush1.bf16.msra.mxu0 %v995
        %999 = vmatprep.subr.bf16.mxu0 0
        %1000 = vmatpush1.bf16.msra.mxu0 0
        %1001 = vmatprep.subr.bf16.mxu0 0
        %1002 = vmatpush1.bf16.msra.mxu0 0
        %1003 = vmatprep.subr.bf16.mxu0 0
        %1004 = vmatpush1.bf16.msra.mxu0 0
        %1005 = vmatprep.subr.bf16.mxu0 0
        %1006 = vmatpush1.bf16.msra.mxu0 0
        %1007 = vmatprep.subr.bf16.mxu0 0
        %1008 = vmatpush1.bf16.msra.mxu0 0
        %1009 = vmatprep.subr.bf16.mxu0 0
        %1010 = vmatpush1.bf16.msra.mxu0 0
        %1011 = vmatprep.subr.bf16.mxu0 0
        %1012 = vmatpush1.bf16.msra.mxu0 0
        %1013 = vmatprep.subr.bf16.mxu0 0
        %1014 = vmatpush1.bf16.msra.mxu0 0
        %1015 = vmatprep.subr.bf16.mxu0 0
        %1016 = vmatpush1.bf16.msra.mxu0 0
        %1017 = vmatprep.subr.bf16.mxu0 0
        %1018 = vmatpush1.bf16.msra.mxu0 0
        %1019 = vmatprep.subr.bf16.mxu0 0
        %1020 = vmatpush1.bf16.msra.mxu0 0
        %1021 = vmatprep.subr.bf16.mxu0 0
        %1022 = vmatpush1.bf16.msra.mxu0 0
        %1023 = vmatprep.subr.bf16.mxu0 0
        %1024 = vmatpush1.bf16.msra.mxu0 0
        %1025 = vmatprep.subr.bf16.mxu0 0
        %1026 = vmatpush1.bf16.msra.mxu0 0
        %1027 = vmatprep.subr.bf16.mxu0 0
        %1028 = vmatpush1.bf16.msra.mxu0 0
        %1029 = vmatprep.mubr.bf16.mxu0 0
        %1030 = vmatmul.mubr.bf16.gmra.mrb[0].mxu0 %v992
        %v1031 = vpop.f32.mrb[0].mxu0
        %v1032 = vadd.f32 0.0, %v1031
        %v1033 = vpop.f32.mrb[0].mxu0
        %v1034 = vpop.f32.mrb[0].mxu0
        %v1035 = vpop.f32.mrb[0].mxu0
        %1036 = vdwg.mxu0
        %v1037 = vpack.c.bf16 %v1032, %v1032
        %v1038 = vld [vmem:[#allocation9 + $0x8] sm:$0xf]
        %v1040 = vsel %vm613, %v1037, 0
        %v1043 = vsel %vm677, %v1038, 0
        %1045 = vmatprep.subr.bf16.mxu0 0
        %1046 = vmatpush1.bf16.msra.mxu0 %v1043
        %1047 = vmatprep.subr.bf16.mxu0 0
        %1048 = vmatpush1.bf16.msra.mxu0 0
        %1049 = vmatprep.subr.bf16.mxu0 0
        %1050 = vmatpush1.bf16.msra.mxu0 0
        %1051 = vmatprep.subr.bf16.mxu0 0
        %1052 = vmatpush1.bf16.msra.mxu0 0
        %1053 = vmatprep.subr.bf16.mxu0 0
        %1054 = vmatpush1.bf16.msra.mxu0 0
        %1055 = vmatprep.subr.bf16.mxu0 0
        %1056 = vmatpush1.bf16.msra.mxu0 0
        %1057 = vmatprep.subr.bf16.mxu0 0
        %1058 = vmatpush1.bf16.msra.mxu0 0
        %1059 = vmatprep.subr.bf16.mxu0 0
        %1060 = vmatpush1.bf16.msra.mxu0 0
        %1061 = vmatprep.subr.bf16.mxu0 0
        %1062 = vmatpush1.bf16.msra.mxu0 0
        %1063 = vmatprep.subr.bf16.mxu0 0
        %1064 = vmatpush1.bf16.msra.mxu0 0
        %1065 = vmatprep.subr.bf16.mxu0 0
        %1066 = vmatpush1.bf16.msra.mxu0 0
        %1067 = vmatprep.subr.bf16.mxu0 0
        %1068 = vmatpush1.bf16.msra.mxu0 0
        %1069 = vmatprep.subr.bf16.mxu0 0
        %1070 = vmatpush1.bf16.msra.mxu0 0
        %1071 = vmatprep.subr.bf16.mxu0 0
        %1072 = vmatpush1.bf16.msra.mxu0 0
        %1073 = vmatprep.subr.bf16.mxu0 0
        %1074 = vmatpush1.bf16.msra.mxu0 0
        %1075 = vmatprep.subr.bf16.mxu0 0
        %1076 = vmatpush1.bf16.msra.mxu0 0
        %1077 = vmatprep.mubr.bf16.mxu0 0
        %1078 = vmatmul.mubr.bf16.gmra.mrb[0].mxu0 %v1040
        %v1079 = vpop.f32.mrb[0].mxu0
        %v1080 = vadd.f32 0.0, %v1079
        %v1081 = vpop.f32.mrb[0].mxu0
        %v1082 = vpop.f32.mrb[0].mxu0
        %v1083 = vpop.f32.mrb[0].mxu0
        %1084 = vdwg.mxu0
        %v1085 = vadd.f32 %v922, %v1080
        %1086 = vrot.lane.b32.xlu0 %v603, 104
        %v1087 = vpop.permute.xlu0 %1086
        %1088 = vrot.lane.b32.xlu0 %v603, 72
        %v1089 = vpop.permute.xlu0 %1088
        %v1091 = vsel %vm613, %v1087, 0
        %v1094 = vsel %vm613, %v1089, 0
        %1096 = vmatprep.subr.bf16.mxu0 0
        %1097 = vmatpush1.bf16.xpose.msra.mxu0 %v1094
        %1098 = vmatprep.subr.bf16.mxu0 0
        %1099 = vmatpush1.bf16.xpose.msra.mxu0 0
        %1100 = vmatprep.subr.bf16.mxu0 0
        %1101 = vmatpush1.bf16.xpose.msra.mxu0 0
        %1102 = vmatprep.subr.bf16.mxu0 0
        %1103 = vmatpush1.bf16.xpose.msra.mxu0 0
        %1104 = vmatprep.subr.bf16.mxu0 0
        %1105 = vmatpush1.bf16.xpose.msra.mxu0 0
        %1106 = vmatprep.subr.bf16.mxu0 0
        %1107 = vmatpush1.bf16.xpose.msra.mxu0 0
        %1108 = vmatprep.subr.bf16.mxu0 0
        %1109 = vmatpush1.bf16.xpose.msra.mxu0 0
        %1110 = vmatprep.subr.bf16.mxu0 0
        %1111 = vmatpush1.bf16.xpose.msra.mxu0 0
        %1112 = vmatprep.subr.bf16.mxu0 0
        %1113 = vmatpush1.bf16.xpose.msra.mxu0 0
        %1114 = vmatprep.subr.bf16.mxu0 0
        %1115 = vmatpush1.bf16.xpose.msra.mxu0 0
        %1116 = vmatprep.subr.bf16.mxu0 0
        %1117 = vmatpush1.bf16.xpose.msra.mxu0 0
        %1118 = vmatprep.subr.bf16.mxu0 0
        %1119 = vmatpush1.bf16.xpose.msra.mxu0 0
        %1120 = vmatprep.subr.bf16.mxu0 0
        %1121 = vmatpush1.bf16.xpose.msra.mxu0 0
        %1122 = vmatprep.subr.bf16.mxu0 0
        %1123 = vmatpush1.bf16.xpose.msra.mxu0 0
        %1124 = vmatprep.subr.bf16.mxu0 0
        %1125 = vmatpush1.bf16.xpose.msra.mxu0 0
        %1126 = vmatprep.subr.bf16.mxu0 0
        %1127 = vmatpush1.bf16.xpose.msra.mxu0 0
        %1128 = vmatprep.mubr.bf16.mxu0 0
        %1129 = vmatmul.mubr.bf16.gmra.mrb[0].mxu0 %v1091
        %v1130 = vpop.f32.mrb[0].mxu0
        %v1131 = vadd.f32 %v609, %v1130
        %v1132 = vpop.f32.mrb[0].mxu0
        %v1133 = vpop.f32.mrb[0].mxu0
        %v1134 = vpop.f32.mrb[0].mxu0
        %1135 = vdwg.mxu0
        %v1136 = vsel %vm613, %v1131, -inf
        %1137 = vmax.xlane.f32.xlu0 %v1136
        %v1138 = vpop.xlane.xlu0 %1137
        %v1139 = vsub.f32 %v1131, %v1138
        %v1140 = vmul.f32 %v1139, 1.442695
        %v1141 = vpow.pop %v1140
        %v1142 = vsel %vm613, %v1141, 0.0
        %1143 = vadd.xlane.f32.xlu0 %v1142
        %v1144 = vpop.xlane.xlu0 %1143
        %v1145 = vrcp.pop %v1144
        %v1146 = vmul.f32 %v1141, %v1145
        %v1147 = vpack.c.bf16 %v1146, %v1146
        %1148 = vrot.lane.b32.xlu0 %v603, 40
        %v1149 = vpop.permute.xlu0 %1148
        %v1151 = vsel %vm613, %v1147, 0
        %v1154 = vsel %vm677, %v1149, 0
        %1156 = vmatprep.subr.bf16.mxu0 0
        %1157 = vmatpush1.bf16.msra.mxu0 %v1154
        %1158 = vmatprep.subr.bf16.mxu0 0
        %1159 = vmatpush1.bf16.msra.mxu0 0
        %1160 = vmatprep.subr.bf16.mxu0 0
        %1161 = vmatpush1.bf16.msra.mxu0 0
        %1162 = vmatprep.subr.bf16.mxu0 0
        %1163 = vmatpush1.bf16.msra.mxu0 0
        %1164 = vmatprep.subr.bf16.mxu0 0
        %1165 = vmatpush1.bf16.msra.mxu0 0
        %1166 = vmatprep.subr.bf16.mxu0 0
        %1167 = vmatpush1.bf16.msra.mxu0 0
        %1168 = vmatprep.subr.bf16.mxu0 0
        %1169 = vmatpush1.bf16.msra.mxu0 0
        %1170 = vmatprep.subr.bf16.mxu0 0
        %1171 = vmatpush1.bf16.msra.mxu0 0
        %1172 = vmatprep.subr.bf16.mxu0 0
        %1173 = vmatpush1.bf16.msra.mxu0 0
        %1174 = vmatprep.subr.bf16.mxu0 0
        %1175 = vmatpush1.bf16.msra.mxu0 0
        %1176 = vmatprep.subr.bf16.mxu0 0
        %1177 = vmatpush1.bf16.msra.mxu0 0
        %1178 = vmatprep.subr.bf16.mxu0 0
        %1179 = vmatpush1.bf16.msra.mxu0 0
        %1180 = vmatprep.subr.bf16.mxu0 0
        %1181 = vmatpush1.bf16.msra.mxu0 0
        %1182 = vmatprep.subr.bf16.mxu0 0
        %1183 = vmatpush1.bf16.msra.mxu0 0
        %1184 = vmatprep.subr.bf16.mxu0 0
        %1185 = vmatpush1.bf16.msra.mxu0 0
        %1186 = vmatprep.subr.bf16.mxu0 0
        %1187 = vmatpush1.bf16.msra.mxu0 0
        %1188 = vmatprep.mubr.bf16.mxu0 0
        %1189 = vmatmul.mubr.bf16.gmra.mrb[0].mxu0 %v1151
        %v1190 = vpop.f32.mrb[0].mxu0
        %v1191 = vadd.f32 0.0, %v1190
        %v1192 = vpop.f32.mrb[0].mxu0
        %v1193 = vpop.f32.mrb[0].mxu0
        %v1194 = vpop.f32.mrb[0].mxu0
        %1195 = vdwg.mxu0
        %v1196 = vpack.c.bf16 %v1191, %v1191
        %v1197 = vld [vmem:[#allocation9 + $0xc] sm:$0xf]
        %v1199 = vsel %vm613, %v1196, 0
        %v1202 = vsel %vm677, %v1197, 0
        %1204 = vmatprep.subr.bf16.mxu0 0
        %1205 = vmatpush1.bf16.msra.mxu0 %v1202
        %1206 = vmatprep.subr.bf16.mxu0 0
        %1207 = vmatpush1.bf16.msra.mxu0 0
        %1208 = vmatprep.subr.bf16.mxu0 0
        %1209 = vmatpush1.bf16.msra.mxu0 0
        %1210 = vmatprep.subr.bf16.mxu0 0
        %1211 = vmatpush1.bf16.msra.mxu0 0
        %1212 = vmatprep.subr.bf16.mxu0 0
        %1213 = vmatpush1.bf16.msra.mxu0 0
        %1214 = vmatprep.subr.bf16.mxu0 0
        %1215 = vmatpush1.bf16.msra.mxu0 0
        %1216 = vmatprep.subr.bf16.mxu0 0
        %1217 = vmatpush1.bf16.msra.mxu0 0
        %1218 = vmatprep.subr.bf16.mxu0 0
        %1219 = vmatpush1.bf16.msra.mxu0 0
        %1220 = vmatprep.subr.bf16.mxu0 0
        %1221 = vmatpush1.bf16.msra.mxu0 0
        %1222 = vmatprep.subr.bf16.mxu0 0
        %1223 = vmatpush1.bf16.msra.mxu0 0
        %1224 = vmatprep.subr.bf16.mxu0 0
        %1225 = vmatpush1.bf16.msra.mxu0 0
        %1226 = vmatprep.subr.bf16.mxu0 0
        %1227 = vmatpush1.bf16.msra.mxu0 0
        %1228 = vmatprep.subr.bf16.mxu0 0
        %1229 = vmatpush1.bf16.msra.mxu0 0
        %1230 = vmatprep.subr.bf16.mxu0 0
        %1231 = vmatpush1.bf16.msra.mxu0 0
        %1232 = vmatprep.subr.bf16.mxu0 0
        %1233 = vmatpush1.bf16.msra.mxu0 0
        %1234 = vmatprep.subr.bf16.mxu0 0
        %1235 = vmatpush1.bf16.msra.mxu0 0
        %1236 = vmatprep.mubr.bf16.mxu0 0
        %1237 = vmatmul.mubr.bf16.gmra.mrb[0].mxu0 %v1199
        %v1238 = vpop.f32.mrb[0].mxu0
        %v1239 = vadd.f32 0.0, %v1238
        %v1240 = vpop.f32.mrb[0].mxu0
        %v1241 = vpop.f32.mrb[0].mxu0
        %v1242 = vpop.f32.mrb[0].mxu0
        %1243 = vdwg.mxu0
        %v1244 = vadd.f32 %v1085, %v1239
        %v1245 = vadd.f32 %v541, %v1244
        %v1246 = vld [vmem:[#allocation16] sm:$0x1]
        %v1247 = vld [vmem:[#allocation18] sm:$0x1]
        %v1248 = vsel %vm559, %v1245, 0.0
        %1249 = vadd.xlane.f32.xlu0 %v1248
        %v1250 = vpop.xlane.xlu0 %1249
        %v1251 = vrcp.pop 32.0
        %v1252 = vmul.f32 %v1250, %v1251
        %v1253 = vsub.f32 %v1245, %v1252
        %v1254 = vmul.f32 %v1253, %v1253
        %v1255 = vsel %vm559, %v1254, 0.0
        %1256 = vadd.xlane.f32.xlu0 %v1255
        %v1257 = vpop.xlane.xlu0 %1256
        %v1258 = vmul.f32 %v1257, %v1251
        %v1259 = vadd.f32 %v1258, 1e-05
        %v1260 = vrsqrt.pop %v1259
        %v1261 = vmul.f32 %v1253, %v1260
        %v1263 = vlaneseq
        %v1264 = vshrl.u32 %v1263, 7
        %v1265 = vsub.s32 0, %v1264
        %v1266 = vrot.slane %v1246, %v1265
        %v1268 = vmul.f32 %v1261, %v1266
        %v1270 = vlaneseq
        %v1271 = vshrl.u32 %v1270, 7
        %v1272 = vsub.s32 0, %v1271
        %v1273 = vrot.slane %v1247, %v1272
        %v1275 = vadd.f32 %v1268, %v1273
        %v1276 = vpack.c.bf16 %v1275, %v1275
        %v1277 = vld [vmem:[#allocation10] sm:$0xf]
        %v1278 = vld [vmem:[#allocation10 + $0x4] sm:$0xf]
        %v1279 = vld [vmem:[#allocation10 + $0x8] sm:$0xf]
        %v1280 = vld [vmem:[#allocation10 + $0xc] sm:$0xf]
        %v1281 = vld [vmem:[#allocation13] sm:$0x1]
        %v1283 = vlaneseq
        %v1284 = vshrl.u32 %v1283, 7
        %v1285 = vsub.s32 0, %v1284
        %v1286 = vrot.slane %v1281, %v1285
        %v1292 = vunpack.c.l.b16 %v1277
        %v1293 = vunpack.c.l.b16 %v1278
        %v1294 = vunpack.c.l.b16 %v1279
        %v1295 = vunpack.c.l.b16 %v1280
        %v1296 = vpack.c.b16 %v1293, %v1292
        %v1297 = vpack.c.b16 %v1295, %v1294
        %v1301 = vsel %vm559, %v1276, 0
        %1303 = vmatprep.subr.bf16.mxu0 0
        %1304 = vmatpush1.bf16.msra.mxu0 %v1296
        %1305 = vmatprep.subr.bf16.mxu0 0
        %1306 = vmatpush1.bf16.msra.mxu0 %v1297
        %1307 = vmatprep.subr.bf16.mxu0 0
        %1308 = vmatpush1.bf16.msra.mxu0 0
        %1309 = vmatprep.subr.bf16.mxu0 0
        %1310 = vmatpush1.bf16.msra.mxu0 0
        %1311 = vmatprep.subr.bf16.mxu0 0
        %1312 = vmatpush1.bf16.msra.mxu0 0
        %1313 = vmatprep.subr.bf16.mxu0 0
        %1314 = vmatpush1.bf16.msra.mxu0 0
        %1315 = vmatprep.subr.bf16.mxu0 0
        %1316 = vmatpush1.bf16.msra.mxu0 0
        %1317 = vmatprep.subr.bf16.mxu0 0
        %1318 = vmatpush1.bf16.msra.mxu0 0
        %1319 = vmatprep.subr.bf16.mxu0 0
        %1320 = vmatpush1.bf16.msra.mxu0 0
        %1321 = vmatprep.subr.bf16.mxu0 0
        %1322 = vmatpush1.bf16.msra.mxu0 0
        %1323 = vmatprep.subr.bf16.mxu0 0
        %1324 = vmatpush1.bf16.msra.mxu0 0
        %1325 = vmatprep.subr.bf16.mxu0 0
        %1326 = vmatpush1.bf16.msra.mxu0 0
        %1327 = vmatprep.subr.bf16.mxu0 0
        %1328 = vmatpush1.bf16.msra.mxu0 0
        %1329 = vmatprep.subr.bf16.mxu0 0
        %1330 = vmatpush1.bf16.msra.mxu0 0
        %1331 = vmatprep.subr.bf16.mxu0 0
        %1332 = vmatpush1.bf16.msra.mxu0 0
        %1333 = vmatprep.subr.bf16.mxu0 0
        %1334 = vmatpush1.bf16.msra.mxu0 0
        %1335 = vmatprep.mubr.bf16.mxu0 0
        %1336 = vmatmul.mubr.bf16.gmra.mrb[0].mxu0 %v1301
        %v1337 = vpop.f32.mrb[0].mxu0
        %v1338 = vadd.f32 %v1286, %v1337
        %v1339 = vpop.f32.mrb[0].mxu0
        %v1340 = vpop.f32.mrb[0].mxu0
        %v1341 = vpop.f32.mrb[0].mxu0
        %1342 = vdwg.mxu0
        %v1343 = vmax.f32 %v1338, 0.0
        %v1344 = vpack.c.bf16 %v1343, %v1343
        %v1345 = vld [vmem:[#allocation12] sm:$0xf]
        %v1346 = vld [vmem:[#allocation12 + $0x4] sm:$0xf]
        %v1347 = vld [vmem:[#allocation12 + $0x8] sm:$0xf]
        %v1348 = vld [vmem:[#allocation12 + $0xc] sm:$0xf]
        %v1349 = vld [vmem:[#allocation12 + $0x10] sm:$0xf]
        %v1350 = vld [vmem:[#allocation12 + $0x14] sm:$0xf]
        %v1351 = vld [vmem:[#allocation12 + $0x18] sm:$0xf]
        %v1352 = vld [vmem:[#allocation12 + $0x1c] sm:$0xf]
        %v1353 = vld [vmem:[#allocation15] sm:$0x1]
        %v1355 = vlaneseq
        %v1356 = vshrl.u32 %v1355, 7
        %v1357 = vsub.s32 0, %v1356
        %v1358 = vrot.slane %v1353, %v1357
        %v1368 = vunpack.c.l.b16 %v1345
        %v1369 = vunpack.c.l.b16 %v1346
        %v1370 = vunpack.c.l.b16 %v1347
        %v1371 = vunpack.c.l.b16 %v1348
        %v1372 = vunpack.c.l.b16 %v1349
        %v1373 = vunpack.c.l.b16 %v1350
        %v1374 = vunpack.c.l.b16 %v1351
        %v1375 = vunpack.c.l.b16 %v1352
        %v1376 = vpack.c.b16 %v1369, %v1368
        %v1377 = vpack.c.b16 %v1371, %v1370
        %v1378 = vpack.c.b16 %v1373, %v1372
        %v1379 = vpack.c.b16 %v1375, %v1374
        %vm1384 = vcmask 523264
        %v1386 = vsel %vm1384, %v1344, 0
        %1388 = vmatprep.subr.bf16.mxu0 0
        %1389 = vmatpush1.bf16.msra.mxu0 %v1376
        %1390 = vmatprep.subr.bf16.mxu0 0
        %1391 = vmatpush1.bf16.msra.mxu0 %v1377
        %1392 = vmatprep.subr.bf16.mxu0 0
        %1393 = vmatpush1.bf16.msra.mxu0 %v1378
        %1394 = vmatprep.subr.bf16.mxu0 0
        %1395 = vmatpush1.bf16.msra.mxu0 %v1379
        %1396 = vmatprep.subr.bf16.mxu0 0
        %1397 = vmatpush1.bf16.msra.mxu0 0
        %1398 = vmatprep.subr.bf16.mxu0 0
        %1399 = vmatpush1.bf16.msra.mxu0 0
        %1400 = vmatprep.subr.bf16.mxu0 0
        %1401 = vmatpush1.bf16.msra.mxu0 0
        %1402 = vmatprep.subr.bf16.mxu0 0
        %1403 = vmatpush1.bf16.msra.mxu0 0
        %1404 = vmatprep.subr.bf16.mxu0 0
        %1405 = vmatpush1.bf16.msra.mxu0 0
        %1406 = vmatprep.subr.bf16.mxu0 0
        %1407 = vmatpush1.bf16.msra.mxu0 0
        %1408 = vmatprep.subr.bf16.mxu0 0
        %1409 = vmatpush1.bf16.msra.mxu0 0
        %1410 = vmatprep.subr.bf16.mxu0 0
        %1411 = vmatpush1.bf16.msra.mxu0 0
        %1412 = vmatprep.subr.bf16.mxu0 0
        %1413 = vmatpush1.bf16.msra.mxu0 0
        %1414 = vmatprep.subr.bf16.mxu0 0
        %1415 = vmatpush1.bf16.msra.mxu0 0
        %1416 = vmatprep.subr.bf16.mxu0 0
        %1417 = vmatpush1.bf16.msra.mxu0 0
        %1418 = vmatprep.subr.bf16.mxu0 0
        %1419 = vmatpush1.bf16.msra.mxu0 0
        %1420 = vmatprep.mubr.bf16.mxu0 0
        %1421 = vmatmul.mubr.bf16.gmra.mrb[0].mxu0 %v1386
        %v1422 = vpop.f32.mrb[0].mxu0
        %v1423 = vadd.f32 %v1358, %v1422
        %v1424 = vpop.f32.mrb[0].mxu0
        %v1425 = vpop.f32.mrb[0].mxu0
        %v1426 = vpop.f32.mrb[0].mxu0
        %1427 = vdwg.mxu0
        %v1428 = vadd.f32 %v1275, %v1423
        %v1429 = vld [vmem:[#allocation19] sm:$0x1]
        %v1430 = vld [vmem:[#allocation21] sm:$0x1]
        %v1431 = vsel %vm559, %v1428, 0.0
        %1432 = vadd.xlane.f32.xlu0 %v1431
        %v1433 = vpop.xlane.xlu0 %1432
        %v1434 = vmul.f32 %v1433, %v1251
        %v1435 = vsub.f32 %v1428, %v1434
        %v1436 = vmul.f32 %v1435, %v1435
        %v1437 = vsel %vm559, %v1436, 0.0
        %1438 = vadd.xlane.f32.xlu0 %v1437
        %v1439 = vpop.xlane.xlu0 %1438
        %v1440 = vmul.f32 %v1439, %v1251
        %v1441 = vadd.f32 %v1440, 1e-05
        %v1442 = vrsqrt.pop %v1441
        %v1443 = vmul.f32 %v1435, %v1442
        %v1445 = vlaneseq
        %v1446 = vshrl.u32 %v1445, 7
        %v1447 = vsub.s32 0, %v1446
        %v1448 = vrot.slane %v1429, %v1447
        %v1450 = vmul.f32 %v1443, %v1448
        %v1452 = vlaneseq
        %v1453 = vshrl.u32 %v1452, 7
        %v1454 = vsub.s32 0, %v1453
        %v1455 = vrot.slane %v1430, %v1454
        %v1457 = vadd.f32 %v1450, %v1455
        %1458 = vst.msk [vmem:[%s539] sm:$0xff] %vm559, %v1457
        %s1459 = sand.u32 %s282, 1
        %s1460 = scalar_lea.sflag [#allocation6], %s1459
        %s1461 = sand.u32 %s282, 1
        %s1462 = smul.addr %s1461, 8
        %s1463 = scalar_lea.vmem [#allocation22], %s1462
        // Predicated region
        $region109: #{tpu_custom_call.1} parent=63 // pred_check
          %p1464 = pneg %p292
        $region110: #{tpu_custom_call.1} parent=63 // pred_check_branch
          %1466 = sbr.rel (%p1464) target = $region112
        $region111: #{tpu_custom_call.1} parent=63 // pred_region
          %s1468 = ssub.s32 128, 128
          %1469 = vsyncadd %s1460, %s1468
          %s1470 = smul.addr %s38, 128
          %s1471 = scalar_lea.hbm %s12, %s1470
          %s1473 = sshll.u32 %s1463, 4
          %s1474 = int_to_ptr.vmem [resolvable:$true] %s1473
          %1476 = dma.vmem_to_hbm [thread:$0]  %s1474, 128, %s1471, %s1460
        $region112: #{tpu_custom_call.1} parent=63 // pred_fallthru
          _
      $region64: #{tpu_custom_call.1} parent=5 // pred_fallthru
        _
      %p1477 = scmp.le.s32.totalorder 2, %s33
      // Predicated region
      $region113: #{tpu_custom_call.1} parent=5 // pred_check
        %p1478 = pneg %p1477
      $region114: #{tpu_custom_call.1} parent=5 // pred_check_branch
        %1480 = sbr.rel (%p1478) target = $region116
      $region115: #{tpu_custom_call.1} parent=5 // pred_region
        %s1481 = ssub.s32 %s33, 2
        // Predicated region
        $region117: #{tpu_custom_call.1} parent=115 // pred_check
          %p1482 = pneg %p298
        $region118: #{tpu_custom_call.1} parent=115 // pred_check_branch
          %1484 = sbr.rel (%p1482) target = $region120
        $region119: #{tpu_custom_call.1} parent=115 // pred_region
          %s1485 = sand.u32 %s283, 1
          %s1486 = scalar_lea.sflag [#allocation6], %s1485
          %s1487 = sand.u32 %s283, 1
          %s1488 = smul.addr %s1487, 8
          %s1489 = scalar_lea.vmem [#allocation22], %s1488
          %1490 = dma.done %s1486, 128
        $region120: #{tpu_custom_call.1} parent=115 // pred_fallthru
          _
      $region116: #{tpu_custom_call.1} parent=5 // pred_fallthru
        _
    $region6: #{tpu_custom_call.1} parent=1 // loop_footer
      %s37 = sadd.s32 1, %s33
    $region7: #{tpu_custom_call.1} parent=1 // loop_footer_branch
      %32 = sbr.rel target = $region3
    $region8: #{tpu_custom_call.1} parent=1 // loop_exit
      _
    %1491 = vsyncpa [#allocation5], 1
    %s1492 = scalar_lea.sflag [#allocation5], 1
    %1493 = vsyncpa %s1492, 1
    %1494 = vsyncpa [#allocation8], 1
    %1495 = vsyncpa [#allocation11], 1
    %1496 = vsyncpa [#allocation14], 1
    %1497 = vsyncpa [#allocation17], 1
    %1498 = vsyncpa [#allocation20], 1
    %1499 = vsyncpa [#allocation6], 1
    %s1500 = scalar_lea.sflag [#allocation6], 1
    %1501 = vsyncpa %s1500, 1

</llo_original>
